<compile_context>
chip_gen: v5e
topology: v5e:2x2
jax: 0.10.0
libtpu: 0.0.40
codegen_flags: <defaults>
</compile_context>

<pallas_src>
import functools

import numpy as np
import jax
import jax.numpy as jnp
from jax import lax
from jax.experimental import pallas as pl
from jax.experimental.pallas import tpu as pltpu

WIN_SIZE = 11      # pytorch-msssim defaults
WIN_SIGMA = 1.5
K1, K2 = 0.01, 0.03
DATA_RANGE = 1.0

# Output-column chunk width for the banded contraction.  246 => a full chunk
# contracts K = 246 + WIN_SIZE - 1 = 256 input columns: MXU-native on v6e/v7x
# and two clean 128-wide passes on v5e (no K padding waste).
_BAND_CHUNK = 246


def _ceil_to(v: int, m: int) -> int:
    return ((v + m - 1) // m) * m


def _gaussian_window_1d(size: int = WIN_SIZE, sigma: float = WIN_SIGMA) -> np.ndarray:
    """Same as pytorch-msssim _fspecial_gauss_1d (deterministic 'parameter')."""
    coords = np.arange(size, dtype=np.float64) - size // 2
    g = np.exp(-(coords ** 2) / (2.0 * sigma ** 2))
    return (g / g.sum()).astype(np.float32)


def _toeplitz_tile(c_tile: int, g: np.ndarray) -> np.ndarray:
    """Shared Toeplitz tile T with (x_slice @ T) == valid 1-D correlation with g.

    T[k, p] = g[k - p] for p <= k < p + len(g), else 0; shape
    (ceil8(c_tile + len(g) - 1), c_tile).  Every full output-column chunk of
    both filter directions multiplies against this exact tile; edge chunks use
    a static prefix slice of it.
    """
    k_tile = _ceil_to(c_tile + len(g) - 1, 8)
    t = np.zeros((k_tile, c_tile), dtype=np.float32)
    for p in range(c_tile):
        t[p:p + len(g), p] = g
    return t


def _conv_valid_cols(x2d, toep_ref, out_pad: int):
    """Valid 1-D correlation of each row of x2d with the Gaussian window.

    x2d: (M, L).  Returns (M, out_pad).  Columns p < L - WIN_SIZE + 1 hold the
    exact valid correlation; columns in [L - WIN_SIZE + 1, out_pad) hold finite
    partial sums that the caller masks out.  Output columns are produced in
    <= C_TILE chunks, each contracting only its overlapping K-slice against the
    shared Toeplitz tile (all bounds are Python ints -> unrolled at trace time).
    """
    in_len = x2d.shape[1]
    k_tile, c_tile = toep_ref.shape
    outs = []
    for c0 in range(0, out_pad, c_tile):
        cn = min(c_tile, out_pad - c0)
        kend = min(c0 + k_tile, in_len)
        outs.append(jnp.dot(x2d[:, c0:kend], toep_ref[:kend - c0, :cn],
                            preferred_element_type=jnp.float32))
    return outs[0] if len(outs) == 1 else jnp.concatenate(outs, axis=1)


def _ssim_kernel(ho, wo, x_ref, y_ref, toep_ref, out_ref):
    """Per-channel SSIM for one batch item.

    x_ref/y_ref : (1, C, H, W)       VMEM blocks
    toep_ref    : (K_TILE, C_TILE)   shared Toeplitz Gaussian tile
    out_ref     : (1, 1, C)          per-step output block
    ho, wo      : true (unpadded) filtered spatial extents (static Python ints)
    """
    _, c, h, w = x_ref.shape
    ho_p = _ceil_to(ho, 8)
    wo_p = _ceil_to(wo, 8)

    # forward() clips to [0, 1] before SSIM.
    x = jnp.clip(x_ref[0].astype(jnp.float32), 0.0, 1.0).reshape(c * h, w)
    y = jnp.clip(y_ref[0].astype(jnp.float32), 0.0, 1.0).reshape(c * h, w)

    # All five filter inputs stacked along the matmul M dimension: each filter
    # direction is ONE tall banded matmul per grid step (was 5 per direction).
    stacked = jnp.concatenate([x, y, x * x, y * y, x * y], axis=0)   # (5*c*h, w)

    t = _conv_valid_cols(stacked, toep_ref, wo_p)                    # (5*c*h, wo_p)
    # Re-orient each (input, channel) block so the H contraction is again over
    # the minor dim: 8-aligned static slices + 2-D minor transposes, done once
    # per step.  The result stays in (q, p) orientation because everything
    # downstream is elementwise plus a full spatial reduction.
    # TODO(synk): collapse into a single batched relayout (pltpu.einshape).
    tt = jnp.concatenate(
        [t[i * h:(i + 1) * h, :].T for i in range(5 * c)], axis=0)   # (5*c*wo_p, h)
    r = _conv_valid_cols(tt, toep_ref, ho_p)                         # (5*c*wo_p, ho_p)

    cw = c * wo_p

    def fmap(i):
        return r[i * cw:(i + 1) * cw, :].reshape(c, wo_p, ho_p)

    mu1, mu2, ex2, ey2, exy = fmap(0), fmap(1), fmap(2), fmap(3), fmap(4)

    mu1_sq = mu1 * mu1
    mu2_sq = mu2 * mu2
    mu1_mu2 = mu1 * mu2
    sigma1_sq = ex2 - mu1_sq           # compensation == 1.0
    sigma2_sq = ey2 - mu2_sq
    sigma12 = exy - mu1_mu2

    c1 = (K1 * DATA_RANGE) ** 2
    c2 = (K2 * DATA_RANGE) ** 2
    # Fused: one divide instead of two (divides occupy the single-issue EUP slot).
    num = (2.0 * mu1_mu2 + c1) * (2.0 * sigma12 + c2)
    den = (mu1_sq + mu2_sq + c1) * (sigma1_sq + sigma2_sq + c2)
    ssim_map = num / den                                             # (c, wo_p, ho_p)

    # Padded rows/cols hold finite junk (den >= c1*c2 > 0), so the mask is
    # mandatory; spatial mean over the true (ho, wo), relu (nonnegative_ssim).
    qi = lax.broadcasted_iota(jnp.int32, (c, wo_p, ho_p), 1)
    pi = lax.broadcasted_iota(jnp.int32, (c, wo_p, ho_p), 2)
    masked = jnp.where((qi < wo) & (pi < ho), ssim_map, 0.0)
    ssim_pc = jnp.sum(jnp.sum(masked, axis=2), axis=1) * (1.0 / (ho * wo))   # (c,)
    out_ref[...] = jnp.maximum(ssim_pc, 0.0).reshape(1, 1, c)


def ssim_per_item(generated, target):
    """Pallas-backed equivalent of Ssim.forward: returns shape (N,) float32."""
    n, c, h, w = generated.shape
    assert h >= WIN_SIZE and w >= WIN_SIZE, "spatial dims must be >= win_size (11)"
    ho, wo = h - WIN_SIZE + 1, w - WIN_SIZE + 1
    ho_p, wo_p = _ceil_to(ho, 8), _ceil_to(wo, 8)

    g = _gaussian_window_1d()
    c_tile = min(_BAND_CHUNK, max(ho_p, wo_p))
    toep = jnp.asarray(_toeplitz_tile(c_tile, g))        # (K_TILE, C_TILE), tiny
    k_tile = toep.shape[0]

    # VMEM budget: double-buffered image blocks + (tiny) Toeplitz tile + the
    # in-kernel stacked inputs, filtered maps and epilogue temporaries, with
    # 2x headroom; capped to 85% of this generation's physical VMEM.
    fp32 = 4
    step_bytes = fp32 * (
        4 * c * h * w                      # x, y blocks (double buffered)
        + 2 * k_tile * c_tile              # Toeplitz tile (double buffered)
        + 6 * c * h * w                    # clipped inputs + stacked products
        + 3 * 5 * c * h * wo_p             # pass-1 result + re-orientation copies
        + 9 * c * wo_p * ho_p              # pass-2 maps + epilogue temporaries
    )
    try:
        vmem_cap = int(pltpu.get_tpu_info().vmem_capacity_bytes)
    except Exception:                      # pragma: no cover - older runtimes
        vmem_cap = 64 << 20
    vmem_limit = int(min(max(2 * step_bytes, 32 << 20), (vmem_cap * 85) // 100))

    kernel = functools.partial(_ssim_kernel, ho, wo)
    per_channel = pl.pallas_call(
        kernel,
        out_shape=jax.ShapeDtypeStruct((n, 1, c), jnp.float32),
        grid=(n,),
        in_specs=[
            pl.BlockSpec((1, c, h, w), lambda b: (b, 0, 0, 0)),
            pl.BlockSpec((1, c, h, w), lambda b: (b, 0, 0, 0)),
            pl.BlockSpec((k_tile, c_tile), lambda b: (0, 0)),
        ],
        out_specs=pl.BlockSpec((1, 1, c), lambda b: (b, 0, 0)),
        compiler_params=pltpu.CompilerParams(
            dimension_semantics=("parallel",),
            vmem_limit_bytes=vmem_limit,
        ),
    )(generated, target, toep)

    # size_average=False -> mean over channels, one value per batch item (glue).
    return jnp.mean(per_channel[:, 0, :], axis=1)


def _band_matrix(out_len: int, in_len: int, g: np.ndarray) -> np.ndarray:
    """Dense banded matrix with (M @ x) == valid 1-D correlation (reference only)."""
    m = np.zeros((out_len, in_len), dtype=np.float32)
    for p in range(out_len):
        m[p, p:p + len(g)] = g
    return m


def _ssim_reference(generated, target):
    """Pure-JAX reference of the same math (pytorch-msssim semantics)."""
    n, c, h, w = generated.shape
    g = _gaussian_window_1d()
    ho, wo = h - WIN_SIZE + 1, w - WIN_SIZE + 1
    gh = jnp.asarray(_band_matrix(ho, h, g))
    gw = jnp.asarray(_band_matrix(wo, w, g))

    x = jnp.clip(generated.astype(jnp.float32), 0.0, 1.0)
    y = jnp.clip(target.astype(jnp.float32), 0.0, 1.0)

    def gfilt(img):
        t = jnp.einsum('nchw,qw->nchq', img, gw, preferred_element_type=jnp.float32)
        return jnp.einsum('ph,nchq->ncpq', gh, t, preferred_element_type=jnp.float32)

    mu1, mu2 = gfilt(x), gfilt(y)
    mu1_sq, mu2_sq, mu1_mu2 = mu1 * mu1, mu2 * mu2, mu1 * mu2
    sigma1_sq = gfilt(x * x) - mu1_sq
    sigma2_sq = gfilt(y * y) - mu2_sq
    sigma12 = gfilt(x * y) - mu1_mu2
    c1 = (K1 * DATA_RANGE) ** 2
    c2 = (K2 * DATA_RANGE) ** 2
    cs_map = (2.0 * sigma12 + c2) / (sigma1_sq + sigma2_sq + c2)
    ssim_map = ((2.0 * mu1_mu2 + c1) / (mu1_sq + mu2_sq + c1)) * cs_map
    return jnp.maximum(ssim_map.mean(axis=(2, 3)), 0.0).mean(axis=1)


if __name__ == "__main__":
    N, C, H, W = 2, 4, 16, 16

    key = jax.random.PRNGKey(0)
    kg, kt = jax.random.split(key)
    # Range slightly outside [0, 1] to exercise the clip in forward().
    generated = jax.random.uniform(kg, (N, C, H, W), jnp.float32, -0.2, 1.2)
    target = jax.random.uniform(kt, (N, C, H, W), jnp.float32, -0.2, 1.2)

    out = jax.block_until_ready(ssim_per_item(generated, target))
    ref = _ssim_reference(generated, target)

    assert out.shape == (N,), out.shape
    assert jnp.allclose(out, ref, atol=1e-5, rtol=1e-5), (out, ref)
    print("KERNEL_OK")
</pallas_src>

<mosaic_0001>
module attributes {stable_mosaic.version = 11 : i64} {
  func.func @_ssim_kernel(%arg0: i32, %arg1: memref<1x4x16x16xf32, #tpu.memory_space<vmem>>, %arg2: memref<1x4x16x16xf32, #tpu.memory_space<vmem>>, %arg3: memref<24x8xf32, #tpu.memory_space<vmem>>, %arg4: memref<1x1x4xf32, #tpu.memory_space<vmem>>) attributes {dimension_semantics = [#tpu.dimension_semantics<parallel>], iteration_bounds = array<i64: 2>, scalar_prefetch = 0 : i64, scratch_operands = 0 : i64, tpu.core_type = #tpu.core_type<tc>, window_params = [{transform_indices = @transform_0, window_bounds = array<i64: 1, 4, 16, 16>}, {transform_indices = @transform_1, window_bounds = array<i64: 1, 4, 16, 16>}, {pipeline_mode = #tpu.pipeline_mode<synchronous>, transform_indices = @transform_2, window_bounds = array<i64: 24, 8>}, {transform_indices = @transform_3, window_bounds = array<i64: 1, 1, 4>}]} {
    %c0 = arith.constant 0 : index
    %c0_0 = arith.constant 0 : index
    %c0_1 = arith.constant 0 : index
    %c0_2 = arith.constant 0 : index
    %0 = vector.load %arg1[%c0, %c0_0, %c0_1, %c0_2] : memref<1x4x16x16xf32, #tpu.memory_space<vmem>>, vector<1x4x16x16xf32>
    %1 = vector.shape_cast %0 : vector<1x4x16x16xf32> to vector<4x16x16xf32>
    %cst = arith.constant 0.000000e+00 : f32
    %cst_3 = arith.constant 1.000000e+00 : f32
    %2 = vector.broadcast %cst : f32 to vector<4x16x16xf32>
    %3 = arith.maximumf %2, %1 : vector<4x16x16xf32>
    %4 = vector.broadcast %cst_3 : f32 to vector<4x16x16xf32>
    %5 = arith.minimumf %4, %3 : vector<4x16x16xf32>
    %6 = vector.shape_cast %5 : vector<4x16x16xf32> to vector<64x16xf32>
    %c0_4 = arith.constant 0 : index
    %c0_5 = arith.constant 0 : index
    %c0_6 = arith.constant 0 : index
    %c0_7 = arith.constant 0 : index
    %7 = vector.load %arg2[%c0_4, %c0_5, %c0_6, %c0_7] : memref<1x4x16x16xf32, #tpu.memory_space<vmem>>, vector<1x4x16x16xf32>
    %8 = vector.shape_cast %7 : vector<1x4x16x16xf32> to vector<4x16x16xf32>
    %cst_8 = arith.constant 0.000000e+00 : f32
    %cst_9 = arith.constant 1.000000e+00 : f32
    %9 = vector.broadcast %cst_8 : f32 to vector<4x16x16xf32>
    %10 = arith.maximumf %9, %8 : vector<4x16x16xf32>
    %11 = vector.broadcast %cst_9 : f32 to vector<4x16x16xf32>
    %12 = arith.minimumf %11, %10 : vector<4x16x16xf32>
    %13 = vector.shape_cast %12 : vector<4x16x16xf32> to vector<64x16xf32>
    %14 = arith.mulf %6, %6 : vector<64x16xf32>
    %15 = arith.mulf %13, %13 : vector<64x16xf32>
    %16 = arith.mulf %6, %13 : vector<64x16xf32>
    %17 = tpu.concatenate %6, %13, %14, %15, %16 in 0 : vector<64x16xf32>, vector<64x16xf32>, vector<64x16xf32>, vector<64x16xf32>, vector<64x16xf32> -> vector<320x16xf32>
    %c0_10 = arith.constant 0 : index
    %c0_11 = arith.constant 0 : index
    %18 = vector.load %arg3[%c0_10, %c0_11] : memref<24x8xf32, #tpu.memory_space<vmem>>, vector<16x8xf32>
    %cst_12 = arith.constant dense<0.000000e+00> : vector<320x8xf32>
    %19 = tpu.matmul %17, %18, %cst_12 {dimension_numbers = #tpu.dot_dimension_numbers<[1], [0], [0], [1], [0, 0, 1, 1], [], []>} : vector<320x16xf32>, vector<16x8xf32>, vector<320x8xf32> -> vector<320x8xf32>
    %20 = vector.extract_strided_slice %19 {offsets = [0, 0], sizes = [16, 8], strides = [1, 1]} : vector<320x8xf32> to vector<16x8xf32>
    %21 = tpu.transpose %20, [1, 0] : vector<16x8xf32> -> vector<8x16xf32>
    %22 = vector.extract_strided_slice %19 {offsets = [16, 0], sizes = [16, 8], strides = [1, 1]} : vector<320x8xf32> to vector<16x8xf32>
    %23 = tpu.transpose %22, [1, 0] : vector<16x8xf32> -> vector<8x16xf32>
    %24 = vector.extract_strided_slice %19 {offsets = [32, 0], sizes = [16, 8], strides = [1, 1]} : vector<320x8xf32> to vector<16x8xf32>
    %25 = tpu.transpose %24, [1, 0] : vector<16x8xf32> -> vector<8x16xf32>
    %26 = vector.extract_strided_slice %19 {offsets = [48, 0], sizes = [16, 8], strides = [1, 1]} : vector<320x8xf32> to vector<16x8xf32>
    %27 = tpu.transpose %26, [1, 0] : vector<16x8xf32> -> vector<8x16xf32>
    %28 = vector.extract_strided_slice %19 {offsets = [64, 0], sizes = [16, 8], strides = [1, 1]} : vector<320x8xf32> to vector<16x8xf32>
    %29 = tpu.transpose %28, [1, 0] : vector<16x8xf32> -> vector<8x16xf32>
    %30 = vector.extract_strided_slice %19 {offsets = [80, 0], sizes = [16, 8], strides = [1, 1]} : vector<320x8xf32> to vector<16x8xf32>
    %31 = tpu.transpose %30, [1, 0] : vector<16x8xf32> -> vector<8x16xf32>
    %32 = vector.extract_strided_slice %19 {offsets = [96, 0], sizes = [16, 8], strides = [1, 1]} : vector<320x8xf32> to vector<16x8xf32>
    %33 = tpu.transpose %32, [1, 0] : vector<16x8xf32> -> vector<8x16xf32>
    %34 = vector.extract_strided_slice %19 {offsets = [112, 0], sizes = [16, 8], strides = [1, 1]} : vector<320x8xf32> to vector<16x8xf32>
    %35 = tpu.transpose %34, [1, 0] : vector<16x8xf32> -> vector<8x16xf32>
    %36 = vector.extract_strided_slice %19 {offsets = [128, 0], sizes = [16, 8], strides = [1, 1]} : vector<320x8xf32> to vector<16x8xf32>
    %37 = tpu.transpose %36, [1, 0] : vector<16x8xf32> -> vector<8x16xf32>
    %38 = vector.extract_strided_slice %19 {offsets = [144, 0], sizes = [16, 8], strides = [1, 1]} : vector<320x8xf32> to vector<16x8xf32>
    %39 = tpu.transpose %38, [1, 0] : vector<16x8xf32> -> vector<8x16xf32>
    %40 = vector.extract_strided_slice %19 {offsets = [160, 0], sizes = [16, 8], strides = [1, 1]} : vector<320x8xf32> to vector<16x8xf32>
    %41 = tpu.transpose %40, [1, 0] : vector<16x8xf32> -> vector<8x16xf32>
    %42 = vector.extract_strided_slice %19 {offsets = [176, 0], sizes = [16, 8], strides = [1, 1]} : vector<320x8xf32> to vector<16x8xf32>
    %43 = tpu.transpose %42, [1, 0] : vector<16x8xf32> -> vector<8x16xf32>
    %44 = vector.extract_strided_slice %19 {offsets = [192, 0], sizes = [16, 8], strides = [1, 1]} : vector<320x8xf32> to vector<16x8xf32>
    %45 = tpu.transpose %44, [1, 0] : vector<16x8xf32> -> vector<8x16xf32>
    %46 = vector.extract_strided_slice %19 {offsets = [208, 0], sizes = [16, 8], strides = [1, 1]} : vector<320x8xf32> to vector<16x8xf32>
    %47 = tpu.transpose %46, [1, 0] : vector<16x8xf32> -> vector<8x16xf32>
    %48 = vector.extract_strided_slice %19 {offsets = [224, 0], sizes = [16, 8], strides = [1, 1]} : vector<320x8xf32> to vector<16x8xf32>
    %49 = tpu.transpose %48, [1, 0] : vector<16x8xf32> -> vector<8x16xf32>
    %50 = vector.extract_strided_slice %19 {offsets = [240, 0], sizes = [16, 8], strides = [1, 1]} : vector<320x8xf32> to vector<16x8xf32>
    %51 = tpu.transpose %50, [1, 0] : vector<16x8xf32> -> vector<8x16xf32>
    %52 = vector.extract_strided_slice %19 {offsets = [256, 0], sizes = [16, 8], strides = [1, 1]} : vector<320x8xf32> to vector<16x8xf32>
    %53 = tpu.transpose %52, [1, 0] : vector<16x8xf32> -> vector<8x16xf32>
    %54 = vector.extract_strided_slice %19 {offsets = [272, 0], sizes = [16, 8], strides = [1, 1]} : vector<320x8xf32> to vector<16x8xf32>
    %55 = tpu.transpose %54, [1, 0] : vector<16x8xf32> -> vector<8x16xf32>
    %56 = vector.extract_strided_slice %19 {offsets = [288, 0], sizes = [16, 8], strides = [1, 1]} : vector<320x8xf32> to vector<16x8xf32>
    %57 = tpu.transpose %56, [1, 0] : vector<16x8xf32> -> vector<8x16xf32>
    %58 = vector.extract_strided_slice %19 {offsets = [304, 0], sizes = [16, 8], strides = [1, 1]} : vector<320x8xf32> to vector<16x8xf32>
    %59 = tpu.transpose %58, [1, 0] : vector<16x8xf32> -> vector<8x16xf32>
    %60 = tpu.concatenate %21, %23, %25, %27, %29, %31, %33, %35, %37, %39, %41, %43, %45, %47, %49, %51 in 0 : vector<8x16xf32>, vector<8x16xf32>, vector<8x16xf32>, vector<8x16xf32>, vector<8x16xf32>, vector<8x16xf32>, vector<8x16xf32>, vector<8x16xf32>, vector<8x16xf32>, vector<8x16xf32>, vector<8x16xf32>, vector<8x16xf32>, vector<8x16xf32>, vector<8x16xf32>, vector<8x16xf32>, vector<8x16xf32> -> vector<128x16xf32>
    %61 = tpu.concatenate %53, %55, %57, %59 in 0 : vector<8x16xf32>, vector<8x16xf32>, vector<8x16xf32>, vector<8x16xf32> -> vector<32x16xf32>
    %62 = tpu.concatenate %60, %61 in 0 : vector<128x16xf32>, vector<32x16xf32> -> vector<160x16xf32>
    %c0_13 = arith.constant 0 : index
    %c0_14 = arith.constant 0 : index
    %63 = vector.load %arg3[%c0_13, %c0_14] : memref<24x8xf32, #tpu.memory_space<vmem>>, vector<16x8xf32>
    %cst_15 = arith.constant dense<0.000000e+00> : vector<160x8xf32>
    %64 = tpu.matmul %62, %63, %cst_15 {dimension_numbers = #tpu.dot_dimension_numbers<[1], [0], [0], [1], [0, 0, 1, 1], [], []>} : vector<160x16xf32>, vector<16x8xf32>, vector<160x8xf32> -> vector<160x8xf32>
    %65 = vector.extract_strided_slice %64 {offsets = [0, 0], sizes = [32, 8], strides = [1, 1]} : vector<160x8xf32> to vector<32x8xf32>
    %66 = vector.shape_cast %65 : vector<32x8xf32> to vector<4x8x8xf32>
    %67 = vector.extract_strided_slice %64 {offsets = [32, 0], sizes = [32, 8], strides = [1, 1]} : vector<160x8xf32> to vector<32x8xf32>
    %68 = vector.shape_cast %67 : vector<32x8xf32> to vector<4x8x8xf32>
    %69 = vector.extract_strided_slice %64 {offsets = [64, 0], sizes = [32, 8], strides = [1, 1]} : vector<160x8xf32> to vector<32x8xf32>
    %70 = vector.shape_cast %69 : vector<32x8xf32> to vector<4x8x8xf32>
    %71 = vector.extract_strided_slice %64 {offsets = [96, 0], sizes = [32, 8], strides = [1, 1]} : vector<160x8xf32> to vector<32x8xf32>
    %72 = vector.shape_cast %71 : vector<32x8xf32> to vector<4x8x8xf32>
    %73 = vector.extract_strided_slice %64 {offsets = [128, 0], sizes = [32, 8], strides = [1, 1]} : vector<160x8xf32> to vector<32x8xf32>
    %74 = vector.shape_cast %73 : vector<32x8xf32> to vector<4x8x8xf32>
    %75 = arith.mulf %66, %66 : vector<4x8x8xf32>
    %76 = arith.mulf %68, %68 : vector<4x8x8xf32>
    %77 = arith.mulf %66, %68 : vector<4x8x8xf32>
    %78 = arith.subf %70, %75 : vector<4x8x8xf32>
    %79 = arith.subf %72, %76 : vector<4x8x8xf32>
    %80 = arith.subf %74, %77 : vector<4x8x8xf32>
    %cst_16 = arith.constant 2.000000e+00 : f32
    %81 = vector.broadcast %cst_16 : f32 to vector<4x8x8xf32>
    %82 = arith.mulf %81, %77 : vector<4x8x8xf32>
    %cst_17 = arith.constant 9.99999974E-5 : f32
    %83 = vector.broadcast %cst_17 : f32 to vector<4x8x8xf32>
    %84 = arith.addf %82, %83 : vector<4x8x8xf32>
    %cst_18 = arith.constant 2.000000e+00 : f32
    %85 = vector.broadcast %cst_18 : f32 to vector<4x8x8xf32>
    %86 = arith.mulf %85, %80 : vector<4x8x8xf32>
    %cst_19 = arith.constant 8.99999984E-4 : f32
    %87 = vector.broadcast %cst_19 : f32 to vector<4x8x8xf32>
    %88 = arith.addf %86, %87 : vector<4x8x8xf32>
    %89 = arith.mulf %84, %88 : vector<4x8x8xf32>
    %90 = arith.addf %75, %76 : vector<4x8x8xf32>
    %cst_20 = arith.constant 9.99999974E-5 : f32
    %91 = vector.broadcast %cst_20 : f32 to vector<4x8x8xf32>
    %92 = arith.addf %90, %91 : vector<4x8x8xf32>
    %93 = arith.addf %78, %79 : vector<4x8x8xf32>
    %cst_21 = arith.constant 8.99999984E-4 : f32
    %94 = vector.broadcast %cst_21 : f32 to vector<4x8x8xf32>
    %95 = arith.addf %93, %94 : vector<4x8x8xf32>
    %96 = arith.mulf %92, %95 : vector<4x8x8xf32>
    %97 = arith.divf %89, %96 : vector<4x8x8xf32>
    %98 = tpu.iota {dimensions = array<i32: 1>} : vector<4x8x8xi32>
    %99 = tpu.iota {dimensions = array<i32: 2>} : vector<4x8x8xi32>
    %c6_i32 = arith.constant 6 : i32
    %100 = vector.broadcast %c6_i32 : i32 to vector<4x8x8xi32>
    %101 = arith.cmpi slt, %98, %100 : vector<4x8x8xi32>
    %c6_i32_22 = arith.constant 6 : i32
    %102 = vector.broadcast %c6_i32_22 : i32 to vector<4x8x8xi32>
    %103 = arith.cmpi slt, %99, %102 : vector<4x8x8xi32>
    %104 = arith.andi %101, %103 : vector<4x8x8xi1>
    %cst_23 = arith.constant 0.000000e+00 : f32
    %105 = vector.broadcast %cst_23 : f32 to vector<4x8x8xf32>
    %106 = arith.select %104, %97, %105 : vector<4x8x8xi1>, vector<4x8x8xf32>
    %cst_24 = arith.constant dense<0.000000e+00> : vector<4x8xf32>
    %107 = vector.multi_reduction <add>, %106, %cst_24 [2] : vector<4x8x8xf32> to vector<4x8xf32>
    %cst_25 = arith.constant dense<0.000000e+00> : vector<4xf32>
    %108 = vector.multi_reduction <add>, %107, %cst_25 [1] : vector<4x8xf32> to vector<4xf32>
    %cst_26 = arith.constant 0.027777778 : f32
    %109 = vector.broadcast %cst_26 : f32 to vector<4xf32>
    %110 = arith.mulf %108, %109 : vector<4xf32>
    %cst_27 = arith.constant 0.000000e+00 : f32
    %111 = vector.broadcast %cst_27 : f32 to vector<4xf32>
    %112 = arith.maximumf %110, %111 : vector<4xf32>
    %113 = vector.shape_cast %112 : vector<4xf32> to vector<1x1x4xf32>
    %c0_28 = arith.constant 0 : index
    %c0_29 = arith.constant 0 : index
    %c0_30 = arith.constant 0 : index
    %114 = vector.load %arg4[%c0_28, %c0_29, %c0_30] : memref<1x1x4xf32, #tpu.memory_space<vmem>>, vector<1x1x4xf32>
    tpu.vector_store %arg4[%c0_28, %c0_29, %c0_30], %113 {strides = array<i32>} : memref<1x1x4xf32, #tpu.memory_space<vmem>>, vector<1x1x4xf32>,
    return
  }
  func.func @transform_0(%arg0: i32) -> (i32, i32, i32, i32) {
    %c0_i32 = arith.constant 0 : i32
    %c0_i32_0 = arith.constant 0 : i32
    %c0_i32_1 = arith.constant 0 : i32
    %c0_i32_2 = arith.constant 0 : i32
    return %arg0, %c0_i32, %c0_i32_0, %c0_i32_1 : i32, i32, i32, i32
  }
  func.func @transform_1(%arg0: i32) -> (i32, i32, i32, i32) {
    %c0_i32 = arith.constant 0 : i32
    %c0_i32_0 = arith.constant 0 : i32
    %c0_i32_1 = arith.constant 0 : i32
    %c0_i32_2 = arith.constant 0 : i32
    return %arg0, %c0_i32, %c0_i32_0, %c0_i32_1 : i32, i32, i32, i32
  }
  func.func @transform_2(%arg0: i32) -> (i32, i32) {
    %c0_i32 = arith.constant 0 : i32
    %c0_i32_0 = arith.constant 0 : i32
    %c0_i32_1 = arith.constant 0 : i32
    return %c0_i32, %c0_i32_0 : i32, i32
  }
  func.func @transform_3(%arg0: i32) -> (i32, i32, i32) {
    %c0_i32 = arith.constant 0 : i32
    %c0_i32_0 = arith.constant 0 : i32
    %c0_i32_1 = arith.constant 0 : i32
    return %arg0, %c0_i32, %c0_i32_0 : i32, i32, i32
  }
}

</mosaic_0001>

<llo_original>
// kernel: tpu_custom_call.1
$region0: #{tpu_custom_call.1}
  #allocation0 [shape = 'u32[]', space=smem, size = 0x4, offset = 0x4, fixed_abs, tag = 'smem constant byte address 0x4 - core index']
  #allocation1 [shape = 'u32[72,128]{1,0:T(1,128)}', space=vmem, size = 0x9000, scoped, tag = 'internal scratch']
  %s0 = inlined_call_operand.hbm [shape: f32[2,4,16,16], index: 0, kind: input, shape index: {}]
  %s1 = inlined_call_operand.hbm [shape: f32[2,4,16,16], index: 1, kind: input, shape index: {}]
  %s2 = inlined_call_operand.vmem [shape: f32[24,8], index: 2, kind: input, shape index: {}]
  %s3 = inlined_call_operand.hbm [shape: f32[2,1,4], index: 3, kind: output, shape index: {}]
  %s4 = sld [smem:[#allocation0]]
  $region53: #{tpu_custom_call.1} parent=0
    _
  %s6 = ssub.s32 1, %s4
  %s7 = scalar_select 0, %s6, %s4
  $region1: #{tpu_custom_call.1} parent=0
    #allocation2 [shape = 'u8[65536]{0}', space=vmem, size = 0x10000, scoped, tag = 'input window, operand 0']
    #allocation3 [shape = 's32[2]{0}', space=sflag, size = 0x8, scoped, tag = 'scoped memory for tpu_custom_call.1']
    #allocation4 [shape = 's32[2]{0}', space=sflag, size = 0x8, scoped, tag = 'scoped memory for tpu_custom_call.1']
    #allocation5 [shape = 'u8[65536]{0}', space=vmem, size = 0x10000, scoped, tag = 'input window, operand 1']
    #allocation6 [shape = 's32[2]{0}', space=sflag, size = 0x8, scoped, tag = 'scoped memory for tpu_custom_call.1']
    #allocation7 [shape = 'u8[1024]{0}', space=vmem, size = 0x400, scoped, tag = 'output window, operand 0']
    %8 = vsyncpa [#allocation3], 0
    %s9 = scalar_lea.sflag [#allocation3], 1
    %10 = vsyncpa %s9, 0
    %11 = vsyncpa [#allocation6], 0
    %s12 = scalar_lea.sflag [#allocation6], 1
    %13 = vsyncpa %s12, 0
    %14 = vsyncpa [#allocation4], 0
    %s15 = scalar_lea.sflag [#allocation4], 1
    %16 = vsyncpa %s15, 0
    loop: start=0, step=1, limit=4
    $region2: #{tpu_custom_call.1} parent=1 // loop_pre_header
      _
    $region3: #{tpu_custom_call.1} parent=1 // loop_header
      %s18 = sphi 0, %s22
      %p19 = scmp.ge.s32.totalorder %s18, 4
      %s28 = sphi 0, %s30
      %s31 = sphi 0, %s28
      %s32 = sphi 0, %s31
      %s48 = sphi 0, %s32
      %s54 = sphi 0, %s56
      %s57 = sphi 0, %s54
      %s58 = sphi 0, %s57
      %s74 = sphi 0, %s58
      %s78 = sphi 0, %s78
      %s80 = sphi 0, %s78
      %s81 = sphi 0, %s80
      %s95 = sphi 0, %s81
      %s101 = sphi 0, %s103
      %s104 = sphi 0, %s101
      %s105 = sphi 0, %s104
      %s121 = sphi 0, %s105
    $region4: #{tpu_custom_call.1} parent=1 // loop_header_branch
      %21 = sbr.rel (%p19) target = $region8
    $region5: #{tpu_custom_call.1} parent=1 // loop_body
      %s23 = ssub.s32 %s18, 1
      %s24 = ssub.s32 %s18, 2
      %s25 = sadd.s32 %s18, 1
      %s26 = ssub.s32 %s18, %s25
      %p27 = scmp.eq.s32.totalorder %s26, 0
      %s29 = sadd.s32 %s28, 1
      %s30 = scalar_select %p27, %s28, %s29
      %p33 = pneg %p27
      %p34 = scmp.eq.s32.totalorder %s18, 1
      %p35 = por %p33, %p34
      %p36 = scmp.ne.s32.totalorder %s28, %s31
      %p37 = scmp.eq.s32.totalorder %s18, 0
      %p38 = por %p36, %p37
      %p39 = scmp.ne.s32.totalorder %s28, %s31
      %p40 = scmp.eq.s32.totalorder %s23, 1
      %p41 = por %p39, %p40
      %p42 = scmp.ne.s32.totalorder %s31, %s32
      %p43 = scmp.eq.s32.totalorder %s23, 0
      %p44 = por %p42, %p43
      %p45 = scmp.ne.s32.totalorder %s31, %s32
      %p46 = scmp.eq.s32.totalorder %s24, 1
      %p47 = por %p45, %p46
      %p49 = scmp.ne.s32.totalorder %s32, %s48
      %p50 = scmp.eq.s32.totalorder %s24, 0
      %p51 = por %p49, %p50
      %s52 = ssub.s32 %s18, %s25
      %p53 = scmp.eq.s32.totalorder %s52, 0
      %s55 = sadd.s32 %s54, 1
      %s56 = scalar_select %p53, %s54, %s55
      %p59 = pneg %p53
      %p60 = scmp.eq.s32.totalorder %s18, 1
      %p61 = por %p59, %p60
      %p62 = scmp.ne.s32.totalorder %s54, %s57
      %p63 = scmp.eq.s32.totalorder %s18, 0
      %p64 = por %p62, %p63
      %p65 = scmp.ne.s32.totalorder %s54, %s57
      %p66 = scmp.eq.s32.totalorder %s23, 1
      %p67 = por %p65, %p66
      %p68 = scmp.ne.s32.totalorder %s57, %s58
      %p69 = scmp.eq.s32.totalorder %s23, 0
      %p70 = por %p68, %p69
      %p71 = scmp.ne.s32.totalorder %s57, %s58
      %p72 = scmp.eq.s32.totalorder %s24, 1
      %p73 = por %p71, %p72
      %p75 = scmp.ne.s32.totalorder %s58, %s74
      %p76 = scmp.eq.s32.totalorder %s24, 0
      %p77 = por %p75, %p76
      %s79 = sadd.s32 %s78, 1
      %p82 = scmp.eq.s32.totalorder %s18, 1
      %p83 = scmp.ne.s32.totalorder %s78, %s80
      %p84 = scmp.eq.s32.totalorder %s18, 0
      %p85 = por %p83, %p84
      %p86 = scmp.ne.s32.totalorder %s78, %s80
      %p87 = scmp.eq.s32.totalorder %s23, 1
      %p88 = por %p86, %p87
      %p89 = scmp.ne.s32.totalorder %s80, %s81
      %p90 = scmp.eq.s32.totalorder %s23, 0
      %p91 = por %p89, %p90
      %p92 = scmp.ne.s32.totalorder %s80, %s81
      %p93 = scmp.eq.s32.totalorder %s24, 1
      %p94 = por %p92, %p93
      %p96 = scmp.ne.s32.totalorder %s81, %s95
      %p97 = scmp.eq.s32.totalorder %s24, 0
      %p98 = por %p96, %p97
      %s99 = ssub.s32 %s18, %s25
      %p100 = scmp.eq.s32.totalorder %s99, 0
      %s102 = sadd.s32 %s101, 1
      %s103 = scalar_select %p100, %s101, %s102
      %p106 = pneg %p100
      %p107 = scmp.eq.s32.totalorder %s18, 1
      %p108 = por %p106, %p107
      %p109 = scmp.ne.s32.totalorder %s101, %s104
      %p110 = scmp.eq.s32.totalorder %s18, 0
      %p111 = por %p109, %p110
      %p112 = scmp.ne.s32.totalorder %s101, %s104
      %p113 = scmp.eq.s32.totalorder %s23, 1
      %p114 = por %p112, %p113
      %p115 = scmp.ne.s32.totalorder %s104, %s105
      %p116 = scmp.eq.s32.totalorder %s23, 0
      %p117 = por %p115, %p116
      %p118 = scmp.ne.s32.totalorder %s104, %s105
      %p119 = scmp.eq.s32.totalorder %s24, 1
      %p120 = por %p118, %p119
      %p122 = scmp.ne.s32.totalorder %s105, %s121
      %p123 = scmp.eq.s32.totalorder %s24, 0
      %p124 = por %p122, %p123
      %p125 = scmp.le.s32.totalorder 1, %s18
      %p126 = scmp.lt.s32.totalorder %s18, 3
      %p127 = pnand %p125, %p126
      %p128 = pneg %p127
      // Predicated region
      $region9: #{tpu_custom_call.1} parent=5 // pred_check
        _
      $region10: #{tpu_custom_call.1} parent=5 // pred_check_branch
        %130 = sbr.rel (%p127) target = $region12
      $region11: #{tpu_custom_call.1} parent=5 // pred_region
        %s131 = ssub.s32 %s18, 1
        // Predicated region
        $region13: #{tpu_custom_call.1} parent=11 // pred_check
          %p132 = pneg %p91
        $region14: #{tpu_custom_call.1} parent=11 // pred_check_branch
          %134 = sbr.rel (%p132) target = $region16
        $region15: #{tpu_custom_call.1} parent=11 // pred_region
          _
        $region16: #{tpu_custom_call.1} parent=11 // pred_fallthru
          _
      $region12: #{tpu_custom_call.1} parent=5 // pred_fallthru
        _
      %p135 = scmp.lt.s32.totalorder %s18, 2
      // Predicated region
      $region17: #{tpu_custom_call.1} parent=5 // pred_check
        %p136 = pneg %p135
      $region18: #{tpu_custom_call.1} parent=5 // pred_check_branch
        %138 = sbr.rel (%p136) target = $region20
      $region19: #{tpu_custom_call.1} parent=5 // pred_region
        // Predicated region
        $region21: #{tpu_custom_call.1} parent=19 // pred_check
          %p139 = pneg %p38
        $region22: #{tpu_custom_call.1} parent=19 // pred_check_branch
          %141 = sbr.rel (%p139) target = $region24
        $region23: #{tpu_custom_call.1} parent=19 // pred_region
          %s142 = sand.u32 %s28, 1
          %s143 = scalar_lea.sflag [#allocation3], %s142
          %s144 = sand.u32 %s28, 1
          %s145 = smul.addr %s144, 64
          %s146 = scalar_lea.vmem [#allocation2], %s145
          %148 = vsyncadd %s143, 0
          %s149 = smul.addr %s18, 8
          %s150 = smul.addr %s149, 8
          %s151 = scalar_lea.hbm %s0, %s150
          %s152 = sshll.u32 %s151, 4
          %s153 = int_to_ptr.hbm [resolvable:$true] %s152
          %s154 = sshll.u32 %s146, 4
          %s155 = int_to_ptr.vmem [resolvable:$true] %s154
          %160 = dma.hbm_to_vmem [thread:$0]  %s153, 1024, %s155, %s143, 128, 128, 8
        $region24: #{tpu_custom_call.1} parent=19 // pred_fallthru
          _
        // Predicated region
        $region25: #{tpu_custom_call.1} parent=19 // pred_check
          %p161 = pneg %p64
        $region26: #{tpu_custom_call.1} parent=19 // pred_check_branch
          %163 = sbr.rel (%p161) target = $region28
        $region27: #{tpu_custom_call.1} parent=19 // pred_region
          %s164 = sand.u32 %s54, 1
          %s165 = scalar_lea.sflag [#allocation6], %s164
          %s166 = sand.u32 %s54, 1
          %s167 = smul.addr %s166, 64
          %s168 = scalar_lea.vmem [#allocation5], %s167
          %170 = vsyncadd %s165, 0
          %s171 = smul.addr %s18, 8
          %s172 = smul.addr %s171, 8
          %s173 = scalar_lea.hbm %s1, %s172
          %s174 = sshll.u32 %s173, 4
          %s175 = int_to_ptr.hbm [resolvable:$true] %s174
          %s176 = sshll.u32 %s168, 4
          %s177 = int_to_ptr.vmem [resolvable:$true] %s176
          %182 = dma.hbm_to_vmem [thread:$0]  %s175, 1024, %s177, %s165, 128, 128, 8
        $region28: #{tpu_custom_call.1} parent=19 // pred_fallthru
          _
      $region20: #{tpu_custom_call.1} parent=5 // pred_fallthru
        _
      %p183 = scmp.le.s32.totalorder 1, %s18
      %p184 = scmp.lt.s32.totalorder %s18, 3
      %p185 = pnand %p183, %p184
      %p186 = pneg %p185
      // Predicated region
      $region29: #{tpu_custom_call.1} parent=5 // pred_check
        _
      $region30: #{tpu_custom_call.1} parent=5 // pred_check_branch
        %188 = sbr.rel (%p185) target = $region32
      $region31: #{tpu_custom_call.1} parent=5 // pred_region
        %s189 = ssub.s32 %s18, 1
        %s190 = sand.u32 %s31, 1
        %s191 = scalar_lea.sflag [#allocation3], %s190
        %s192 = sand.u32 %s31, 1
        %s193 = smul.addr %s192, 64
        %s194 = scalar_lea.vmem [#allocation2], %s193
        // Predicated region
        $region33: #{tpu_custom_call.1} parent=31 // pred_check
          %p195 = pneg %p44
        $region34: #{tpu_custom_call.1} parent=31 // pred_check_branch
          %197 = sbr.rel (%p195) target = $region36
        $region35: #{tpu_custom_call.1} parent=31 // pred_region
          %199 = dma.done %s191, 1024
        $region36: #{tpu_custom_call.1} parent=31 // pred_fallthru
          _
        %s200 = sand.u32 %s57, 1
        %s201 = scalar_lea.sflag [#allocation6], %s200
        %s202 = sand.u32 %s57, 1
        %s203 = smul.addr %s202, 64
        %s204 = scalar_lea.vmem [#allocation5], %s203
        // Predicated region
        $region37: #{tpu_custom_call.1} parent=31 // pred_check
          %p205 = pneg %p70
        $region38: #{tpu_custom_call.1} parent=31 // pred_check_branch
          %207 = sbr.rel (%p205) target = $region40
        $region39: #{tpu_custom_call.1} parent=31 // pred_region
          %209 = dma.done %s201, 1024
        $region40: #{tpu_custom_call.1} parent=31 // pred_fallthru
          _
        %s210 = sand.u32 %s31, 1
        %s211 = scalar_lea.sflag [#allocation3], %s210
        %s212 = sand.u32 %s31, 1
        %s213 = smul.addr %s212, 64
        %s214 = scalar_lea.vmem [#allocation2], %s213
        %p215 = pneg %p44
        %p216 = pneg %p41
        %s217 = sand.u32 %s57, 1
        %s218 = scalar_lea.sflag [#allocation6], %s217
        %s219 = sand.u32 %s57, 1
        %s220 = smul.addr %s219, 64
        %s221 = scalar_lea.vmem [#allocation5], %s220
        %p222 = pneg %p70
        %p223 = pneg %p67
        %p224 = pneg %p91
        %p225 = pneg %p88
        %p226 = pneg %p117
        %p227 = pneg %p114
        %s228 = sand.u32 %s104, 1
        %s229 = scalar_lea.sflag [#allocation4], %s228
        %s230 = sand.u32 %s104, 1
        %s231 = scalar_lea.vmem [#allocation7], %s230
        %v232 = vld [vmem:[%s194] sm:$0xff]
        %v233 = vld [vmem:[%s194 + $0x8] sm:$0xff]
        %v234 = vld [vmem:[%s194 + $0x10] sm:$0xff]
        %v235 = vld [vmem:[%s194 + $0x18] sm:$0xff]
        %v236 = vld [vmem:[%s194 + $0x20] sm:$0xff]
        %v237 = vld [vmem:[%s194 + $0x28] sm:$0xff]
        %v238 = vld [vmem:[%s194 + $0x30] sm:$0xff]
        %v239 = vld [vmem:[%s194 + $0x38] sm:$0xff]
        %v240 = vmax.f32 %v232, 0.0
        %v241 = vmax.f32 %v233, 0.0
        %v242 = vmax.f32 %v234, 0.0
        %v243 = vmax.f32 %v235, 0.0
        %v244 = vmax.f32 %v236, 0.0
        %v245 = vmax.f32 %v237, 0.0
        %v246 = vmax.f32 %v238, 0.0
        %v247 = vmax.f32 %v239, 0.0
        %v248 = vmin.f32 %v240, 1.0
        %v249 = vmin.f32 %v241, 1.0
        %v250 = vmin.f32 %v242, 1.0
        %v251 = vmin.f32 %v243, 1.0
        %v252 = vmin.f32 %v244, 1.0
        %v253 = vmin.f32 %v245, 1.0
        %v254 = vmin.f32 %v246, 1.0
        %v255 = vmin.f32 %v247, 1.0
        %v256 = vld [vmem:[%s204] sm:$0xff]
        %v257 = vld [vmem:[%s204 + $0x8] sm:$0xff]
        %v258 = vld [vmem:[%s204 + $0x10] sm:$0xff]
        %v259 = vld [vmem:[%s204 + $0x18] sm:$0xff]
        %v260 = vld [vmem:[%s204 + $0x20] sm:$0xff]
        %v261 = vld [vmem:[%s204 + $0x28] sm:$0xff]
        %v262 = vld [vmem:[%s204 + $0x30] sm:$0xff]
        %v263 = vld [vmem:[%s204 + $0x38] sm:$0xff]
        %v264 = vmax.f32 %v256, 0.0
        %v265 = vmax.f32 %v257, 0.0
        %v266 = vmax.f32 %v258, 0.0
        %v267 = vmax.f32 %v259, 0.0
        %v268 = vmax.f32 %v260, 0.0
        %v269 = vmax.f32 %v261, 0.0
        %v270 = vmax.f32 %v262, 0.0
        %v271 = vmax.f32 %v263, 0.0
        %v272 = vmin.f32 %v264, 1.0
        %v273 = vmin.f32 %v265, 1.0
        %v274 = vmin.f32 %v266, 1.0
        %v275 = vmin.f32 %v267, 1.0
        %v276 = vmin.f32 %v268, 1.0
        %v277 = vmin.f32 %v269, 1.0
        %v278 = vmin.f32 %v270, 1.0
        %v279 = vmin.f32 %v271, 1.0
        %v280 = vmul.f32 %v248, %v248
        %v281 = vmul.f32 %v249, %v249
        %v282 = vmul.f32 %v250, %v250
        %v283 = vmul.f32 %v251, %v251
        %v284 = vmul.f32 %v252, %v252
        %v285 = vmul.f32 %v253, %v253
        %v286 = vmul.f32 %v254, %v254
        %v287 = vmul.f32 %v255, %v255
        %v288 = vmul.f32 %v272, %v272
        %v289 = vmul.f32 %v273, %v273
        %v290 = vmul.f32 %v274, %v274
        %v291 = vmul.f32 %v275, %v275
        %v292 = vmul.f32 %v276, %v276
        %v293 = vmul.f32 %v277, %v277
        %v294 = vmul.f32 %v278, %v278
        %v295 = vmul.f32 %v279, %v279
        %v296 = vmul.f32 %v248, %v272
        %v297 = vmul.f32 %v249, %v273
        %v298 = vmul.f32 %v250, %v274
        %v299 = vmul.f32 %v251, %v275
        %v300 = vmul.f32 %v252, %v276
        %v301 = vmul.f32 %v253, %v277
        %v302 = vmul.f32 %v254, %v278
        %v303 = vmul.f32 %v255, %v279
        %v304 = vld [vmem:[%s2] sm:$0xff]
        %v305 = vld [vmem:[%s2 + $0x8] sm:$0xff]
        %vm306 = vcmask 130048
        %v308 = vsel %vm306, %v248, 0
        %v311 = vsel %vm306, %v249, 0
        %v314 = vsel %vm306, %v250, 0
        %v317 = vsel %vm306, %v251, 0
        %v320 = vsel %vm306, %v252, 0
        %v323 = vsel %vm306, %v253, 0
        %v326 = vsel %vm306, %v254, 0
        %v329 = vsel %vm306, %v255, 0
        %v332 = vsel %vm306, %v272, 0
        %v335 = vsel %vm306, %v273, 0
        %v338 = vsel %vm306, %v274, 0
        %v341 = vsel %vm306, %v275, 0
        %v344 = vsel %vm306, %v276, 0
        %v347 = vsel %vm306, %v277, 0
        %v350 = vsel %vm306, %v278, 0
        %v353 = vsel %vm306, %v279, 0
        %v356 = vsel %vm306, %v280, 0
        %v359 = vsel %vm306, %v281, 0
        %v362 = vsel %vm306, %v282, 0
        %v365 = vsel %vm306, %v283, 0
        %v368 = vsel %vm306, %v284, 0
        %v371 = vsel %vm306, %v285, 0
        %v374 = vsel %vm306, %v286, 0
        %v377 = vsel %vm306, %v287, 0
        %v380 = vsel %vm306, %v288, 0
        %v383 = vsel %vm306, %v289, 0
        %v386 = vsel %vm306, %v290, 0
        %v389 = vsel %vm306, %v291, 0
        %v392 = vsel %vm306, %v292, 0
        %v395 = vsel %vm306, %v293, 0
        %v398 = vsel %vm306, %v294, 0
        %v401 = vsel %vm306, %v295, 0
        %v404 = vsel %vm306, %v296, 0
        %v407 = vsel %vm306, %v297, 0
        %v410 = vsel %vm306, %v298, 0
        %v413 = vsel %vm306, %v299, 0
        %v416 = vsel %vm306, %v300, 0
        %v419 = vsel %vm306, %v301, 0
        %v422 = vsel %vm306, %v302, 0
        %v425 = vsel %vm306, %v303, 0
        %427 = vmatpush.msra.mxu0 0.0
        %428 = vmatpush.msra.mxu0 0.0
        %429 = vmatpush.msra.mxu0 0.0
        %430 = vmatpush.msra.mxu0 0.0
        %431 = vmatpush.msra.mxu0 0.0
        %432 = vmatpush.msra.mxu0 0.0
        %433 = vmatpush.msra.mxu0 0.0
        %434 = vmatpush.msra.mxu0 0.0
        %435 = vmatpush.msra.mxu0 0.0
        %436 = vmatpush.msra.mxu0 0.0
        %437 = vmatpush.msra.mxu0 0.0
        %438 = vmatpush.msra.mxu0 0.0
        %439 = vmatpush.msra.mxu0 0.0
        %440 = vmatpush.msra.mxu0 0.0
        %441 = vmatpush.msra.mxu0 %v305
        %442 = vmatpush.msra.mxu0 %v304
        %443 = vmatmul.f32.gmra.mxu0 %v308
        %v444 = vpop.f32.mrf.mxu0
        %v445 = vadd.f32 0.0, %v444
        %446 = vmatmul.f32.gmra.mxu0 %v311
        %v447 = vpop.f32.mrf.mxu0
        %v448 = vadd.f32 0.0, %v447
        %449 = vmatmul.f32.gmra.mxu0 %v314
        %v450 = vpop.f32.mrf.mxu0
        %v451 = vadd.f32 0.0, %v450
        %452 = vmatmul.f32.gmra.mxu0 %v317
        %v453 = vpop.f32.mrf.mxu0
        %v454 = vadd.f32 0.0, %v453
        %455 = vmatmul.f32.gmra.mxu0 %v320
        %v456 = vpop.f32.mrf.mxu0
        %v457 = vadd.f32 0.0, %v456
        %458 = vmatmul.f32.gmra.mxu0 %v323
        %v459 = vpop.f32.mrf.mxu0
        %v460 = vadd.f32 0.0, %v459
        %461 = vmatmul.f32.gmra.mxu0 %v326
        %v462 = vpop.f32.mrf.mxu0
        %v463 = vadd.f32 0.0, %v462
        %464 = vmatmul.f32.gmra.mxu0 %v329
        %v465 = vpop.f32.mrf.mxu0
        %v466 = vadd.f32 0.0, %v465
        %467 = vmatmul.f32.gmra.mxu0 %v332
        %v468 = vpop.f32.mrf.mxu0
        %v469 = vadd.f32 0.0, %v468
        %470 = vmatmul.f32.gmra.mxu0 %v335
        %v471 = vpop.f32.mrf.mxu0
        %v472 = vadd.f32 0.0, %v471
        %473 = vmatmul.f32.gmra.mxu0 %v338
        %v474 = vpop.f32.mrf.mxu0
        %v475 = vadd.f32 0.0, %v474
        %476 = vmatmul.f32.gmra.mxu0 %v341
        %v477 = vpop.f32.mrf.mxu0
        %v478 = vadd.f32 0.0, %v477
        %479 = vmatmul.f32.gmra.mxu0 %v344
        %v480 = vpop.f32.mrf.mxu0
        %v481 = vadd.f32 0.0, %v480
        %482 = vmatmul.f32.gmra.mxu0 %v347
        %v483 = vpop.f32.mrf.mxu0
        %v484 = vadd.f32 0.0, %v483
        %485 = vmatmul.f32.gmra.mxu0 %v350
        %v486 = vpop.f32.mrf.mxu0
        %v487 = vadd.f32 0.0, %v486
        %488 = vmatmul.f32.gmra.mxu0 %v353
        %v489 = vpop.f32.mrf.mxu0
        %v490 = vadd.f32 0.0, %v489
        %491 = vmatmul.f32.gmra.mxu0 %v356
        %v492 = vpop.f32.mrf.mxu0
        %v493 = vadd.f32 0.0, %v492
        %494 = vmatmul.f32.gmra.mxu0 %v359
        %v495 = vpop.f32.mrf.mxu0
        %v496 = vadd.f32 0.0, %v495
        %497 = vmatmul.f32.gmra.mxu0 %v362
        %v498 = vpop.f32.mrf.mxu0
        %v499 = vadd.f32 0.0, %v498
        %500 = vmatmul.f32.gmra.mxu0 %v365
        %v501 = vpop.f32.mrf.mxu0
        %v502 = vadd.f32 0.0, %v501
        %503 = vmatmul.f32.gmra.mxu0 %v368
        %v504 = vpop.f32.mrf.mxu0
        %v505 = vadd.f32 0.0, %v504
        %506 = vmatmul.f32.gmra.mxu0 %v371
        %v507 = vpop.f32.mrf.mxu0
        %v508 = vadd.f32 0.0, %v507
        %509 = vmatmul.f32.gmra.mxu0 %v374
        %v510 = vpop.f32.mrf.mxu0
        %v511 = vadd.f32 0.0, %v510
        %512 = vmatmul.f32.gmra.mxu0 %v377
        %v513 = vpop.f32.mrf.mxu0
        %v514 = vadd.f32 0.0, %v513
        %515 = vmatmul.f32.gmra.mxu0 %v380
        %v516 = vpop.f32.mrf.mxu0
        %v517 = vadd.f32 0.0, %v516
        %518 = vmatmul.f32.gmra.mxu0 %v383
        %v519 = vpop.f32.mrf.mxu0
        %v520 = vadd.f32 0.0, %v519
        %521 = vmatmul.f32.gmra.mxu0 %v386
        %v522 = vpop.f32.mrf.mxu0
        %v523 = vadd.f32 0.0, %v522
        %524 = vmatmul.f32.gmra.mxu0 %v389
        %v525 = vpop.f32.mrf.mxu0
        %v526 = vadd.f32 0.0, %v525
        %527 = vmatmul.f32.gmra.mxu0 %v392
        %v528 = vpop.f32.mrf.mxu0
        %v529 = vadd.f32 0.0, %v528
        %530 = vmatmul.f32.gmra.mxu0 %v395
        %v531 = vpop.f32.mrf.mxu0
        %v532 = vadd.f32 0.0, %v531
        %533 = vmatmul.f32.gmra.mxu0 %v398
        %v534 = vpop.f32.mrf.mxu0
        %v535 = vadd.f32 0.0, %v534
        %536 = vmatmul.f32.gmra.mxu0 %v401
        %v537 = vpop.f32.mrf.mxu0
        %v538 = vadd.f32 0.0, %v537
        %539 = vmatmul.f32.gmra.mxu0 %v404
        %v540 = vpop.f32.mrf.mxu0
        %v541 = vadd.f32 0.0, %v540
        %542 = vmatmul.f32.gmra.mxu0 %v407
        %v543 = vpop.f32.mrf.mxu0
        %v544 = vadd.f32 0.0, %v543
        %545 = vmatmul.f32.gmra.mxu0 %v410
        %v546 = vpop.f32.mrf.mxu0
        %v547 = vadd.f32 0.0, %v546
        %548 = vmatmul.f32.gmra.mxu0 %v413
        %v549 = vpop.f32.mrf.mxu0
        %v550 = vadd.f32 0.0, %v549
        %551 = vmatmul.f32.gmra.mxu0 %v416
        %v552 = vpop.f32.mrf.mxu0
        %v553 = vadd.f32 0.0, %v552
        %554 = vmatmul.f32.gmra.mxu0 %v419
        %v555 = vpop.f32.mrf.mxu0
        %v556 = vadd.f32 0.0, %v555
        %557 = vmatmul.f32.gmra.mxu0 %v422
        %v558 = vpop.f32.mrf.mxu0
        %v559 = vadd.f32 0.0, %v558
        %560 = vmatmul.f32.gmra.mxu0 %v425
        %v561 = vpop.f32.mrf.mxu0
        %v562 = vadd.f32 0.0, %v561
        %563 = vdwg.mxu0
        %564 = vxpose.xlu0.b32.start [1/16] %v445, 128
        %565 = vxpose.xlu0.b32.cont [2/16] %v448, 128
        %566 = vxpose.xlu0.b32.cont [3/16] 0.0, 128
        %567 = vxpose.xlu0.b32.cont [4/16] 0.0, 128
        %568 = vxpose.xlu0.b32.cont [5/16] 0.0, 128
        %569 = vxpose.xlu0.b32.cont [6/16] 0.0, 128
        %570 = vxpose.xlu0.b32.cont [7/16] 0.0, 128
        %571 = vxpose.xlu0.b32.cont [8/16] 0.0, 128
        %572 = vxpose.xlu0.b32.cont [9/16] 0.0, 128
        %573 = vxpose.xlu0.b32.cont [10/16] 0.0, 128
        %574 = vxpose.xlu0.b32.cont [11/16] 0.0, 128
        %575 = vxpose.xlu0.b32.cont [12/16] 0.0, 128
        %576 = vxpose.xlu0.b32.cont [13/16] 0.0, 128
        %577 = vxpose.xlu0.b32.cont [14/16] 0.0, 128
        %578 = vxpose.xlu0.b32.cont [15/16] 0.0, 128
        %579 = vxpose.xlu0.b32.end [16/16] 0.0, 128
        %v580 = vpop.trf.xlu0
        %v581 = vpop.trf.xlu0
        %v582 = vpop.trf.xlu0
        %v583 = vpop.trf.xlu0
        %v584 = vpop.trf.xlu0
        %v585 = vpop.trf.xlu0
        %v586 = vpop.trf.xlu0
        %v587 = vpop.trf.xlu0
        %v588 = vpop.trf.xlu0
        %v589 = vpop.trf.xlu0
        %v590 = vpop.trf.xlu0
        %v591 = vpop.trf.xlu0
        %v592 = vpop.trf.xlu0
        %v593 = vpop.trf.xlu0
        %v594 = vpop.trf.xlu0
        %v595 = vpop.trf.xlu0
        %596 = vxpose.xlu0.b32.start [1/16] %v451, 128
        %597 = vxpose.xlu0.b32.cont [2/16] %v454, 128
        %598 = vxpose.xlu0.b32.cont [3/16] 0.0, 128
        %599 = vxpose.xlu0.b32.cont [4/16] 0.0, 128
        %600 = vxpose.xlu0.b32.cont [5/16] 0.0, 128
        %601 = vxpose.xlu0.b32.cont [6/16] 0.0, 128
        %602 = vxpose.xlu0.b32.cont [7/16] 0.0, 128
        %603 = vxpose.xlu0.b32.cont [8/16] 0.0, 128
        %604 = vxpose.xlu0.b32.cont [9/16] 0.0, 128
        %605 = vxpose.xlu0.b32.cont [10/16] 0.0, 128
        %606 = vxpose.xlu0.b32.cont [11/16] 0.0, 128
        %607 = vxpose.xlu0.b32.cont [12/16] 0.0, 128
        %608 = vxpose.xlu0.b32.cont [13/16] 0.0, 128
        %609 = vxpose.xlu0.b32.cont [14/16] 0.0, 128
        %610 = vxpose.xlu0.b32.cont [15/16] 0.0, 128
        %611 = vxpose.xlu0.b32.end [16/16] 0.0, 128
        %v612 = vpop.trf.xlu0
        %v613 = vpop.trf.xlu0
        %v614 = vpop.trf.xlu0
        %v615 = vpop.trf.xlu0
        %v616 = vpop.trf.xlu0
        %v617 = vpop.trf.xlu0
        %v618 = vpop.trf.xlu0
        %v619 = vpop.trf.xlu0
        %v620 = vpop.trf.xlu0
        %v621 = vpop.trf.xlu0
        %v622 = vpop.trf.xlu0
        %v623 = vpop.trf.xlu0
        %v624 = vpop.trf.xlu0
        %v625 = vpop.trf.xlu0
        %v626 = vpop.trf.xlu0
        %v627 = vpop.trf.xlu0
        %628 = vxpose.xlu0.b32.start [1/16] %v457, 128
        %629 = vxpose.xlu0.b32.cont [2/16] %v460, 128
        %630 = vxpose.xlu0.b32.cont [3/16] 0.0, 128
        %631 = vxpose.xlu0.b32.cont [4/16] 0.0, 128
        %632 = vxpose.xlu0.b32.cont [5/16] 0.0, 128
        %633 = vxpose.xlu0.b32.cont [6/16] 0.0, 128
        %634 = vxpose.xlu0.b32.cont [7/16] 0.0, 128
        %635 = vxpose.xlu0.b32.cont [8/16] 0.0, 128
        %636 = vxpose.xlu0.b32.cont [9/16] 0.0, 128
        %637 = vxpose.xlu0.b32.cont [10/16] 0.0, 128
        %638 = vxpose.xlu0.b32.cont [11/16] 0.0, 128
        %639 = vxpose.xlu0.b32.cont [12/16] 0.0, 128
        %640 = vxpose.xlu0.b32.cont [13/16] 0.0, 128
        %641 = vxpose.xlu0.b32.cont [14/16] 0.0, 128
        %642 = vxpose.xlu0.b32.cont [15/16] 0.0, 128
        %643 = vxpose.xlu0.b32.end [16/16] 0.0, 128
        %v644 = vpop.trf.xlu0
        %v645 = vpop.trf.xlu0
        %v646 = vpop.trf.xlu0
        %v647 = vpop.trf.xlu0
        %v648 = vpop.trf.xlu0
        %v649 = vpop.trf.xlu0
        %v650 = vpop.trf.xlu0
        %v651 = vpop.trf.xlu0
        %v652 = vpop.trf.xlu0
        %v653 = vpop.trf.xlu0
        %v654 = vpop.trf.xlu0
        %v655 = vpop.trf.xlu0
        %v656 = vpop.trf.xlu0
        %v657 = vpop.trf.xlu0
        %v658 = vpop.trf.xlu0
        %v659 = vpop.trf.xlu0
        %660 = vxpose.xlu0.b32.start [1/16] %v463, 128
        %661 = vxpose.xlu0.b32.cont [2/16] %v466, 128
        %662 = vxpose.xlu0.b32.cont [3/16] 0.0, 128
        %663 = vxpose.xlu0.b32.cont [4/16] 0.0, 128
        %664 = vxpose.xlu0.b32.cont [5/16] 0.0, 128
        %665 = vxpose.xlu0.b32.cont [6/16] 0.0, 128
        %666 = vxpose.xlu0.b32.cont [7/16] 0.0, 128
        %667 = vxpose.xlu0.b32.cont [8/16] 0.0, 128
        %668 = vxpose.xlu0.b32.cont [9/16] 0.0, 128
        %669 = vxpose.xlu0.b32.cont [10/16] 0.0, 128
        %670 = vxpose.xlu0.b32.cont [11/16] 0.0, 128
        %671 = vxpose.xlu0.b32.cont [12/16] 0.0, 128
        %672 = vxpose.xlu0.b32.cont [13/16] 0.0, 128
        %673 = vxpose.xlu0.b32.cont [14/16] 0.0, 128
        %674 = vxpose.xlu0.b32.cont [15/16] 0.0, 128
        %675 = vxpose.xlu0.b32.end [16/16] 0.0, 128
        %v676 = vpop.trf.xlu0
        %v677 = vpop.trf.xlu0
        %v678 = vpop.trf.xlu0
        %v679 = vpop.trf.xlu0
        %v680 = vpop.trf.xlu0
        %v681 = vpop.trf.xlu0
        %v682 = vpop.trf.xlu0
        %v683 = vpop.trf.xlu0
        %v684 = vpop.trf.xlu0
        %v685 = vpop.trf.xlu0
        %v686 = vpop.trf.xlu0
        %v687 = vpop.trf.xlu0
        %v688 = vpop.trf.xlu0
        %v689 = vpop.trf.xlu0
        %v690 = vpop.trf.xlu0
        %v691 = vpop.trf.xlu0
        %692 = vxpose.xlu0.b32.start [1/16] %v469, 128
        %693 = vxpose.xlu0.b32.cont [2/16] %v472, 128
        %694 = vxpose.xlu0.b32.cont [3/16] 0.0, 128
        %695 = vxpose.xlu0.b32.cont [4/16] 0.0, 128
        %696 = vxpose.xlu0.b32.cont [5/16] 0.0, 128
        %697 = vxpose.xlu0.b32.cont [6/16] 0.0, 128
        %698 = vxpose.xlu0.b32.cont [7/16] 0.0, 128
        %699 = vxpose.xlu0.b32.cont [8/16] 0.0, 128
        %700 = vxpose.xlu0.b32.cont [9/16] 0.0, 128
        %701 = vxpose.xlu0.b32.cont [10/16] 0.0, 128
        %702 = vxpose.xlu0.b32.cont [11/16] 0.0, 128
        %703 = vxpose.xlu0.b32.cont [12/16] 0.0, 128
        %704 = vxpose.xlu0.b32.cont [13/16] 0.0, 128
        %705 = vxpose.xlu0.b32.cont [14/16] 0.0, 128
        %706 = vxpose.xlu0.b32.cont [15/16] 0.0, 128
        %707 = vxpose.xlu0.b32.end [16/16] 0.0, 128
        %v708 = vpop.trf.xlu0
        %v709 = vpop.trf.xlu0
        %v710 = vpop.trf.xlu0
        %v711 = vpop.trf.xlu0
        %v712 = vpop.trf.xlu0
        %v713 = vpop.trf.xlu0
        %v714 = vpop.trf.xlu0
        %v715 = vpop.trf.xlu0
        %v716 = vpop.trf.xlu0
        %v717 = vpop.trf.xlu0
        %v718 = vpop.trf.xlu0
        %v719 = vpop.trf.xlu0
        %v720 = vpop.trf.xlu0
        %v721 = vpop.trf.xlu0
        %v722 = vpop.trf.xlu0
        %v723 = vpop.trf.xlu0
        %724 = vxpose.xlu0.b32.start [1/16] %v475, 128
        %725 = vxpose.xlu0.b32.cont [2/16] %v478, 128
        %726 = vxpose.xlu0.b32.cont [3/16] 0.0, 128
        %727 = vxpose.xlu0.b32.cont [4/16] 0.0, 128
        %728 = vxpose.xlu0.b32.cont [5/16] 0.0, 128
        %729 = vxpose.xlu0.b32.cont [6/16] 0.0, 128
        %730 = vxpose.xlu0.b32.cont [7/16] 0.0, 128
        %731 = vxpose.xlu0.b32.cont [8/16] 0.0, 128
        %732 = vxpose.xlu0.b32.cont [9/16] 0.0, 128
        %733 = vxpose.xlu0.b32.cont [10/16] 0.0, 128
        %734 = vxpose.xlu0.b32.cont [11/16] 0.0, 128
        %735 = vxpose.xlu0.b32.cont [12/16] 0.0, 128
        %736 = vxpose.xlu0.b32.cont [13/16] 0.0, 128
        %737 = vxpose.xlu0.b32.cont [14/16] 0.0, 128
        %738 = vxpose.xlu0.b32.cont [15/16] 0.0, 128
        %739 = vxpose.xlu0.b32.end [16/16] 0.0, 128
        %v740 = vpop.trf.xlu0
        %v741 = vpop.trf.xlu0
        %v742 = vpop.trf.xlu0
        %v743 = vpop.trf.xlu0
        %v744 = vpop.trf.xlu0
        %v745 = vpop.trf.xlu0
        %v746 = vpop.trf.xlu0
        %v747 = vpop.trf.xlu0
        %v748 = vpop.trf.xlu0
        %v749 = vpop.trf.xlu0
        %v750 = vpop.trf.xlu0
        %v751 = vpop.trf.xlu0
        %v752 = vpop.trf.xlu0
        %v753 = vpop.trf.xlu0
        %v754 = vpop.trf.xlu0
        %v755 = vpop.trf.xlu0
        %756 = vxpose.xlu0.b32.start [1/16] %v481, 128
        %757 = vxpose.xlu0.b32.cont [2/16] %v484, 128
        %758 = vxpose.xlu0.b32.cont [3/16] 0.0, 128
        %759 = vxpose.xlu0.b32.cont [4/16] 0.0, 128
        %760 = vxpose.xlu0.b32.cont [5/16] 0.0, 128
        %761 = vxpose.xlu0.b32.cont [6/16] 0.0, 128
        %762 = vxpose.xlu0.b32.cont [7/16] 0.0, 128
        %763 = vxpose.xlu0.b32.cont [8/16] 0.0, 128
        %764 = vxpose.xlu0.b32.cont [9/16] 0.0, 128
        %765 = vxpose.xlu0.b32.cont [10/16] 0.0, 128
        %766 = vxpose.xlu0.b32.cont [11/16] 0.0, 128
        %767 = vxpose.xlu0.b32.cont [12/16] 0.0, 128
        %768 = vxpose.xlu0.b32.cont [13/16] 0.0, 128
        %769 = vxpose.xlu0.b32.cont [14/16] 0.0, 128
        %770 = vxpose.xlu0.b32.cont [15/16] 0.0, 128
        %771 = vxpose.xlu0.b32.end [16/16] 0.0, 128
        %v772 = vpop.trf.xlu0
        %v773 = vpop.trf.xlu0
        %v774 = vpop.trf.xlu0
        %v775 = vpop.trf.xlu0
        %v776 = vpop.trf.xlu0
        %v777 = vpop.trf.xlu0
        %v778 = vpop.trf.xlu0
        %v779 = vpop.trf.xlu0
        %v780 = vpop.trf.xlu0
        %v781 = vpop.trf.xlu0
        %v782 = vpop.trf.xlu0
        %v783 = vpop.trf.xlu0
        %v784 = vpop.trf.xlu0
        %v785 = vpop.trf.xlu0
        %v786 = vpop.trf.xlu0
        %v787 = vpop.trf.xlu0
        %788 = vxpose.xlu0.b32.start [1/16] %v487, 128
        %789 = vxpose.xlu0.b32.cont [2/16] %v490, 128
        %790 = vxpose.xlu0.b32.cont [3/16] 0.0, 128
        %791 = vxpose.xlu0.b32.cont [4/16] 0.0, 128
        %792 = vxpose.xlu0.b32.cont [5/16] 0.0, 128
        %793 = vxpose.xlu0.b32.cont [6/16] 0.0, 128
        %794 = vxpose.xlu0.b32.cont [7/16] 0.0, 128
        %795 = vxpose.xlu0.b32.cont [8/16] 0.0, 128
        %796 = vxpose.xlu0.b32.cont [9/16] 0.0, 128
        %797 = vxpose.xlu0.b32.cont [10/16] 0.0, 128
        %798 = vxpose.xlu0.b32.cont [11/16] 0.0, 128
        %799 = vxpose.xlu0.b32.cont [12/16] 0.0, 128
        %800 = vxpose.xlu0.b32.cont [13/16] 0.0, 128
        %801 = vxpose.xlu0.b32.cont [14/16] 0.0, 128
        %802 = vxpose.xlu0.b32.cont [15/16] 0.0, 128
        %803 = vxpose.xlu0.b32.end [16/16] 0.0, 128
        %v804 = vpop.trf.xlu0
        %v805 = vpop.trf.xlu0
        %v806 = vpop.trf.xlu0
        %v807 = vpop.trf.xlu0
        %v808 = vpop.trf.xlu0
        %v809 = vpop.trf.xlu0
        %v810 = vpop.trf.xlu0
        %v811 = vpop.trf.xlu0
        %v812 = vpop.trf.xlu0
        %v813 = vpop.trf.xlu0
        %v814 = vpop.trf.xlu0
        %v815 = vpop.trf.xlu0
        %v816 = vpop.trf.xlu0
        %v817 = vpop.trf.xlu0
        %v818 = vpop.trf.xlu0
        %v819 = vpop.trf.xlu0
        %820 = vxpose.xlu0.b32.start [1/16] %v493, 128
        %821 = vxpose.xlu0.b32.cont [2/16] %v496, 128
        %822 = vxpose.xlu0.b32.cont [3/16] 0.0, 128
        %823 = vxpose.xlu0.b32.cont [4/16] 0.0, 128
        %824 = vxpose.xlu0.b32.cont [5/16] 0.0, 128
        %825 = vxpose.xlu0.b32.cont [6/16] 0.0, 128
        %826 = vxpose.xlu0.b32.cont [7/16] 0.0, 128
        %827 = vxpose.xlu0.b32.cont [8/16] 0.0, 128
        %828 = vxpose.xlu0.b32.cont [9/16] 0.0, 128
        %829 = vxpose.xlu0.b32.cont [10/16] 0.0, 128
        %830 = vxpose.xlu0.b32.cont [11/16] 0.0, 128
        %831 = vxpose.xlu0.b32.cont [12/16] 0.0, 128
        %832 = vxpose.xlu0.b32.cont [13/16] 0.0, 128
        %833 = vxpose.xlu0.b32.cont [14/16] 0.0, 128
        %834 = vxpose.xlu0.b32.cont [15/16] 0.0, 128
        %835 = vxpose.xlu0.b32.end [16/16] 0.0, 128
        %v836 = vpop.trf.xlu0
        %v837 = vpop.trf.xlu0
        %v838 = vpop.trf.xlu0
        %v839 = vpop.trf.xlu0
        %v840 = vpop.trf.xlu0
        %v841 = vpop.trf.xlu0
        %v842 = vpop.trf.xlu0
        %v843 = vpop.trf.xlu0
        %v844 = vpop.trf.xlu0
        %v845 = vpop.trf.xlu0
        %v846 = vpop.trf.xlu0
        %v847 = vpop.trf.xlu0
        %v848 = vpop.trf.xlu0
        %v849 = vpop.trf.xlu0
        %v850 = vpop.trf.xlu0
        %v851 = vpop.trf.xlu0
        %852 = vxpose.xlu0.b32.start [1/16] %v499, 128
        %853 = vxpose.xlu0.b32.cont [2/16] %v502, 128
        %854 = vxpose.xlu0.b32.cont [3/16] 0.0, 128
        %855 = vxpose.xlu0.b32.cont [4/16] 0.0, 128
        %856 = vxpose.xlu0.b32.cont [5/16] 0.0, 128
        %857 = vxpose.xlu0.b32.cont [6/16] 0.0, 128
        %858 = vxpose.xlu0.b32.cont [7/16] 0.0, 128
        %859 = vxpose.xlu0.b32.cont [8/16] 0.0, 128
        %860 = vxpose.xlu0.b32.cont [9/16] 0.0, 128
        %861 = vxpose.xlu0.b32.cont [10/16] 0.0, 128
        %862 = vxpose.xlu0.b32.cont [11/16] 0.0, 128
        %863 = vxpose.xlu0.b32.cont [12/16] 0.0, 128
        %864 = vxpose.xlu0.b32.cont [13/16] 0.0, 128
        %865 = vxpose.xlu0.b32.cont [14/16] 0.0, 128
        %866 = vxpose.xlu0.b32.cont [15/16] 0.0, 128
        %867 = vxpose.xlu0.b32.end [16/16] 0.0, 128
        %v868 = vpop.trf.xlu0
        %v869 = vpop.trf.xlu0
        %v870 = vpop.trf.xlu0
        %v871 = vpop.trf.xlu0
        %v872 = vpop.trf.xlu0
        %v873 = vpop.trf.xlu0
        %v874 = vpop.trf.xlu0
        %v875 = vpop.trf.xlu0
        %v876 = vpop.trf.xlu0
        %v877 = vpop.trf.xlu0
        %v878 = vpop.trf.xlu0
        %v879 = vpop.trf.xlu0
        %v880 = vpop.trf.xlu0
        %v881 = vpop.trf.xlu0
        %v882 = vpop.trf.xlu0
        %v883 = vpop.trf.xlu0
        %884 = vxpose.xlu0.b32.start [1/16] %v505, 128
        %885 = vxpose.xlu0.b32.cont [2/16] %v508, 128
        %886 = vxpose.xlu0.b32.cont [3/16] 0.0, 128
        %887 = vxpose.xlu0.b32.cont [4/16] 0.0, 128
        %888 = vxpose.xlu0.b32.cont [5/16] 0.0, 128
        %889 = vxpose.xlu0.b32.cont [6/16] 0.0, 128
        %890 = vxpose.xlu0.b32.cont [7/16] 0.0, 128
        %891 = vxpose.xlu0.b32.cont [8/16] 0.0, 128
        %892 = vxpose.xlu0.b32.cont [9/16] 0.0, 128
        %893 = vxpose.xlu0.b32.cont [10/16] 0.0, 128
        %894 = vxpose.xlu0.b32.cont [11/16] 0.0, 128
        %895 = vxpose.xlu0.b32.cont [12/16] 0.0, 128
        %896 = vxpose.xlu0.b32.cont [13/16] 0.0, 128
        %897 = vxpose.xlu0.b32.cont [14/16] 0.0, 128
        %898 = vxpose.xlu0.b32.cont [15/16] 0.0, 128
        %899 = vxpose.xlu0.b32.end [16/16] 0.0, 128
        %v900 = vpop.trf.xlu0
        %v901 = vpop.trf.xlu0
        %v902 = vpop.trf.xlu0
        %v903 = vpop.trf.xlu0
        %v904 = vpop.trf.xlu0
        %v905 = vpop.trf.xlu0
        %v906 = vpop.trf.xlu0
        %v907 = vpop.trf.xlu0
        %v908 = vpop.trf.xlu0
        %v909 = vpop.trf.xlu0
        %v910 = vpop.trf.xlu0
        %v911 = vpop.trf.xlu0
        %v912 = vpop.trf.xlu0
        %v913 = vpop.trf.xlu0
        %v914 = vpop.trf.xlu0
        %v915 = vpop.trf.xlu0
        %916 = vxpose.xlu0.b32.start [1/16] %v511, 128
        %917 = vxpose.xlu0.b32.cont [2/16] %v514, 128
        %918 = vxpose.xlu0.b32.cont [3/16] 0.0, 128
        %919 = vxpose.xlu0.b32.cont [4/16] 0.0, 128
        %920 = vxpose.xlu0.b32.cont [5/16] 0.0, 128
        %921 = vxpose.xlu0.b32.cont [6/16] 0.0, 128
        %922 = vxpose.xlu0.b32.cont [7/16] 0.0, 128
        %923 = vxpose.xlu0.b32.cont [8/16] 0.0, 128
        %924 = vxpose.xlu0.b32.cont [9/16] 0.0, 128
        %925 = vxpose.xlu0.b32.cont [10/16] 0.0, 128
        %926 = vxpose.xlu0.b32.cont [11/16] 0.0, 128
        %927 = vxpose.xlu0.b32.cont [12/16] 0.0, 128
        %928 = vxpose.xlu0.b32.cont [13/16] 0.0, 128
        %929 = vxpose.xlu0.b32.cont [14/16] 0.0, 128
        %930 = vxpose.xlu0.b32.cont [15/16] 0.0, 128
        %931 = vxpose.xlu0.b32.end [16/16] 0.0, 128
        %v932 = vpop.trf.xlu0
        %v933 = vpop.trf.xlu0
        %v934 = vpop.trf.xlu0
        %v935 = vpop.trf.xlu0
        %v936 = vpop.trf.xlu0
        %v937 = vpop.trf.xlu0
        %v938 = vpop.trf.xlu0
        %v939 = vpop.trf.xlu0
        %v940 = vpop.trf.xlu0
        %v941 = vpop.trf.xlu0
        %v942 = vpop.trf.xlu0
        %v943 = vpop.trf.xlu0
        %v944 = vpop.trf.xlu0
        %v945 = vpop.trf.xlu0
        %v946 = vpop.trf.xlu0
        %v947 = vpop.trf.xlu0
        %948 = vxpose.xlu0.b32.start [1/16] %v517, 128
        %949 = vxpose.xlu0.b32.cont [2/16] %v520, 128
        %950 = vxpose.xlu0.b32.cont [3/16] 0.0, 128
        %951 = vxpose.xlu0.b32.cont [4/16] 0.0, 128
        %952 = vxpose.xlu0.b32.cont [5/16] 0.0, 128
        %953 = vxpose.xlu0.b32.cont [6/16] 0.0, 128
        %954 = vxpose.xlu0.b32.cont [7/16] 0.0, 128
        %955 = vxpose.xlu0.b32.cont [8/16] 0.0, 128
        %956 = vxpose.xlu0.b32.cont [9/16] 0.0, 128
        %957 = vxpose.xlu0.b32.cont [10/16] 0.0, 128
        %958 = vxpose.xlu0.b32.cont [11/16] 0.0, 128
        %959 = vxpose.xlu0.b32.cont [12/16] 0.0, 128
        %960 = vxpose.xlu0.b32.cont [13/16] 0.0, 128
        %961 = vxpose.xlu0.b32.cont [14/16] 0.0, 128
        %962 = vxpose.xlu0.b32.cont [15/16] 0.0, 128
        %963 = vxpose.xlu0.b32.end [16/16] 0.0, 128
        %v964 = vpop.trf.xlu0
        %v965 = vpop.trf.xlu0
        %v966 = vpop.trf.xlu0
        %v967 = vpop.trf.xlu0
        %v968 = vpop.trf.xlu0
        %v969 = vpop.trf.xlu0
        %v970 = vpop.trf.xlu0
        %v971 = vpop.trf.xlu0
        %v972 = vpop.trf.xlu0
        %v973 = vpop.trf.xlu0
        %v974 = vpop.trf.xlu0
        %v975 = vpop.trf.xlu0
        %v976 = vpop.trf.xlu0
        %v977 = vpop.trf.xlu0
        %v978 = vpop.trf.xlu0
        %v979 = vpop.trf.xlu0
        %980 = vxpose.xlu0.b32.start [1/16] %v523, 128
        %981 = vxpose.xlu0.b32.cont [2/16] %v526, 128
        %982 = vxpose.xlu0.b32.cont [3/16] 0.0, 128
        %983 = vxpose.xlu0.b32.cont [4/16] 0.0, 128
        %984 = vxpose.xlu0.b32.cont [5/16] 0.0, 128
        %985 = vxpose.xlu0.b32.cont [6/16] 0.0, 128
        %986 = vxpose.xlu0.b32.cont [7/16] 0.0, 128
        %987 = vxpose.xlu0.b32.cont [8/16] 0.0, 128
        %988 = vxpose.xlu0.b32.cont [9/16] 0.0, 128
        %989 = vxpose.xlu0.b32.cont [10/16] 0.0, 128
        %990 = vxpose.xlu0.b32.cont [11/16] 0.0, 128
        %991 = vxpose.xlu0.b32.cont [12/16] 0.0, 128
        %992 = vxpose.xlu0.b32.cont [13/16] 0.0, 128
        %993 = vxpose.xlu0.b32.cont [14/16] 0.0, 128
        %994 = vxpose.xlu0.b32.cont [15/16] 0.0, 128
        %995 = vxpose.xlu0.b32.end [16/16] 0.0, 128
        %v996 = vpop.trf.xlu0
        %v997 = vpop.trf.xlu0
        %v998 = vpop.trf.xlu0
        %v999 = vpop.trf.xlu0
        %v1000 = vpop.trf.xlu0
        %v1001 = vpop.trf.xlu0
        %v1002 = vpop.trf.xlu0
        %v1003 = vpop.trf.xlu0
        %v1004 = vpop.trf.xlu0
        %v1005 = vpop.trf.xlu0
        %v1006 = vpop.trf.xlu0
        %v1007 = vpop.trf.xlu0
        %v1008 = vpop.trf.xlu0
        %v1009 = vpop.trf.xlu0
        %v1010 = vpop.trf.xlu0
        %v1011 = vpop.trf.xlu0
        %1012 = vxpose.xlu0.b32.start [1/16] %v529, 128
        %1013 = vxpose.xlu0.b32.cont [2/16] %v532, 128
        %1014 = vxpose.xlu0.b32.cont [3/16] 0.0, 128
        %1015 = vxpose.xlu0.b32.cont [4/16] 0.0, 128
        %1016 = vxpose.xlu0.b32.cont [5/16] 0.0, 128
        %1017 = vxpose.xlu0.b32.cont [6/16] 0.0, 128
        %1018 = vxpose.xlu0.b32.cont [7/16] 0.0, 128
        %1019 = vxpose.xlu0.b32.cont [8/16] 0.0, 128
        %1020 = vxpose.xlu0.b32.cont [9/16] 0.0, 128
        %1021 = vxpose.xlu0.b32.cont [10/16] 0.0, 128
        %1022 = vxpose.xlu0.b32.cont [11/16] 0.0, 128
        %1023 = vxpose.xlu0.b32.cont [12/16] 0.0, 128
        %1024 = vxpose.xlu0.b32.cont [13/16] 0.0, 128
        %1025 = vxpose.xlu0.b32.cont [14/16] 0.0, 128
        %1026 = vxpose.xlu0.b32.cont [15/16] 0.0, 128
        %1027 = vxpose.xlu0.b32.end [16/16] 0.0, 128
        %v1028 = vpop.trf.xlu0
        %v1029 = vpop.trf.xlu0
        %v1030 = vpop.trf.xlu0
        %v1031 = vpop.trf.xlu0
        %v1032 = vpop.trf.xlu0
        %v1033 = vpop.trf.xlu0
        %v1034 = vpop.trf.xlu0
        %v1035 = vpop.trf.xlu0
        %v1036 = vpop.trf.xlu0
        %v1037 = vpop.trf.xlu0
        %v1038 = vpop.trf.xlu0
        %v1039 = vpop.trf.xlu0
        %v1040 = vpop.trf.xlu0
        %v1041 = vpop.trf.xlu0
        %v1042 = vpop.trf.xlu0
        %v1043 = vpop.trf.xlu0
        %1044 = vxpose.xlu0.b32.start [1/16] %v535, 128
        %1045 = vxpose.xlu0.b32.cont [2/16] %v538, 128
        %1046 = vxpose.xlu0.b32.cont [3/16] 0.0, 128
        %1047 = vxpose.xlu0.b32.cont [4/16] 0.0, 128
        %1048 = vxpose.xlu0.b32.cont [5/16] 0.0, 128
        %1049 = vxpose.xlu0.b32.cont [6/16] 0.0, 128
        %1050 = vxpose.xlu0.b32.cont [7/16] 0.0, 128
        %1051 = vxpose.xlu0.b32.cont [8/16] 0.0, 128
        %1052 = vxpose.xlu0.b32.cont [9/16] 0.0, 128
        %1053 = vxpose.xlu0.b32.cont [10/16] 0.0, 128
        %1054 = vxpose.xlu0.b32.cont [11/16] 0.0, 128
        %1055 = vxpose.xlu0.b32.cont [12/16] 0.0, 128
        %1056 = vxpose.xlu0.b32.cont [13/16] 0.0, 128
        %1057 = vxpose.xlu0.b32.cont [14/16] 0.0, 128
        %1058 = vxpose.xlu0.b32.cont [15/16] 0.0, 128
        %1059 = vxpose.xlu0.b32.end [16/16] 0.0, 128
        %v1060 = vpop.trf.xlu0
        %v1061 = vpop.trf.xlu0
        %v1062 = vpop.trf.xlu0
        %v1063 = vpop.trf.xlu0
        %v1064 = vpop.trf.xlu0
        %v1065 = vpop.trf.xlu0
        %v1066 = vpop.trf.xlu0
        %v1067 = vpop.trf.xlu0
        %v1068 = vpop.trf.xlu0
        %v1069 = vpop.trf.xlu0
        %v1070 = vpop.trf.xlu0
        %v1071 = vpop.trf.xlu0
        %v1072 = vpop.trf.xlu0
        %v1073 = vpop.trf.xlu0
        %v1074 = vpop.trf.xlu0
        %v1075 = vpop.trf.xlu0
        %1076 = vxpose.xlu0.b32.start [1/16] %v541, 128
        %1077 = vxpose.xlu0.b32.cont [2/16] %v544, 128
        %1078 = vxpose.xlu0.b32.cont [3/16] 0.0, 128
        %1079 = vxpose.xlu0.b32.cont [4/16] 0.0, 128
        %1080 = vxpose.xlu0.b32.cont [5/16] 0.0, 128
        %1081 = vxpose.xlu0.b32.cont [6/16] 0.0, 128
        %1082 = vxpose.xlu0.b32.cont [7/16] 0.0, 128
        %1083 = vxpose.xlu0.b32.cont [8/16] 0.0, 128
        %1084 = vxpose.xlu0.b32.cont [9/16] 0.0, 128
        %1085 = vxpose.xlu0.b32.cont [10/16] 0.0, 128
        %1086 = vxpose.xlu0.b32.cont [11/16] 0.0, 128
        %1087 = vxpose.xlu0.b32.cont [12/16] 0.0, 128
        %1088 = vxpose.xlu0.b32.cont [13/16] 0.0, 128
        %1089 = vxpose.xlu0.b32.cont [14/16] 0.0, 128
        %1090 = vxpose.xlu0.b32.cont [15/16] 0.0, 128
        %1091 = vxpose.xlu0.b32.end [16/16] 0.0, 128
        %v1092 = vpop.trf.xlu0
        %v1093 = vpop.trf.xlu0
        %v1094 = vpop.trf.xlu0
        %v1095 = vpop.trf.xlu0
        %v1096 = vpop.trf.xlu0
        %v1097 = vpop.trf.xlu0
        %v1098 = vpop.trf.xlu0
        %v1099 = vpop.trf.xlu0
        %v1100 = vpop.trf.xlu0
        %v1101 = vpop.trf.xlu0
        %v1102 = vpop.trf.xlu0
        %v1103 = vpop.trf.xlu0
        %v1104 = vpop.trf.xlu0
        %v1105 = vpop.trf.xlu0
        %v1106 = vpop.trf.xlu0
        %v1107 = vpop.trf.xlu0
        %1108 = vxpose.xlu0.b32.start [1/16] %v547, 128
        %1109 = vxpose.xlu0.b32.cont [2/16] %v550, 128
        %1110 = vxpose.xlu0.b32.cont [3/16] 0.0, 128
        %1111 = vxpose.xlu0.b32.cont [4/16] 0.0, 128
        %1112 = vxpose.xlu0.b32.cont [5/16] 0.0, 128
        %1113 = vxpose.xlu0.b32.cont [6/16] 0.0, 128
        %1114 = vxpose.xlu0.b32.cont [7/16] 0.0, 128
        %1115 = vxpose.xlu0.b32.cont [8/16] 0.0, 128
        %1116 = vxpose.xlu0.b32.cont [9/16] 0.0, 128
        %1117 = vxpose.xlu0.b32.cont [10/16] 0.0, 128
        %1118 = vxpose.xlu0.b32.cont [11/16] 0.0, 128
        %1119 = vxpose.xlu0.b32.cont [12/16] 0.0, 128
        %1120 = vxpose.xlu0.b32.cont [13/16] 0.0, 128
        %1121 = vxpose.xlu0.b32.cont [14/16] 0.0, 128
        %1122 = vxpose.xlu0.b32.cont [15/16] 0.0, 128
        %1123 = vxpose.xlu0.b32.end [16/16] 0.0, 128
        %v1124 = vpop.trf.xlu0
        %v1125 = vpop.trf.xlu0
        %v1126 = vpop.trf.xlu0
        %v1127 = vpop.trf.xlu0
        %v1128 = vpop.trf.xlu0
        %v1129 = vpop.trf.xlu0
        %v1130 = vpop.trf.xlu0
        %v1131 = vpop.trf.xlu0
        %v1132 = vpop.trf.xlu0
        %v1133 = vpop.trf.xlu0
        %v1134 = vpop.trf.xlu0
        %v1135 = vpop.trf.xlu0
        %v1136 = vpop.trf.xlu0
        %v1137 = vpop.trf.xlu0
        %v1138 = vpop.trf.xlu0
        %v1139 = vpop.trf.xlu0
        %1140 = vxpose.xlu0.b32.start [1/16] %v553, 128
        %1141 = vxpose.xlu0.b32.cont [2/16] %v556, 128
        %1142 = vxpose.xlu0.b32.cont [3/16] 0.0, 128
        %1143 = vxpose.xlu0.b32.cont [4/16] 0.0, 128
        %1144 = vxpose.xlu0.b32.cont [5/16] 0.0, 128
        %1145 = vxpose.xlu0.b32.cont [6/16] 0.0, 128
        %1146 = vxpose.xlu0.b32.cont [7/16] 0.0, 128
        %1147 = vxpose.xlu0.b32.cont [8/16] 0.0, 128
        %1148 = vxpose.xlu0.b32.cont [9/16] 0.0, 128
        %1149 = vxpose.xlu0.b32.cont [10/16] 0.0, 128
        %1150 = vxpose.xlu0.b32.cont [11/16] 0.0, 128
        %1151 = vxpose.xlu0.b32.cont [12/16] 0.0, 128
        %1152 = vxpose.xlu0.b32.cont [13/16] 0.0, 128
        %1153 = vxpose.xlu0.b32.cont [14/16] 0.0, 128
        %1154 = vxpose.xlu0.b32.cont [15/16] 0.0, 128
        %1155 = vxpose.xlu0.b32.end [16/16] 0.0, 128
        %v1156 = vpop.trf.xlu0
        %v1157 = vpop.trf.xlu0
        %v1158 = vpop.trf.xlu0
        %v1159 = vpop.trf.xlu0
        %v1160 = vpop.trf.xlu0
        %v1161 = vpop.trf.xlu0
        %v1162 = vpop.trf.xlu0
        %v1163 = vpop.trf.xlu0
        %v1164 = vpop.trf.xlu0
        %v1165 = vpop.trf.xlu0
        %v1166 = vpop.trf.xlu0
        %v1167 = vpop.trf.xlu0
        %v1168 = vpop.trf.xlu0
        %v1169 = vpop.trf.xlu0
        %v1170 = vpop.trf.xlu0
        %v1171 = vpop.trf.xlu0
        %1172 = vxpose.xlu0.b32.start [1/16] %v559, 128
        %1173 = vxpose.xlu0.b32.cont [2/16] %v562, 128
        %1174 = vxpose.xlu0.b32.cont [3/16] 0.0, 128
        %1175 = vxpose.xlu0.b32.cont [4/16] 0.0, 128
        %1176 = vxpose.xlu0.b32.cont [5/16] 0.0, 128
        %1177 = vxpose.xlu0.b32.cont [6/16] 0.0, 128
        %1178 = vxpose.xlu0.b32.cont [7/16] 0.0, 128
        %1179 = vxpose.xlu0.b32.cont [8/16] 0.0, 128
        %1180 = vxpose.xlu0.b32.cont [9/16] 0.0, 128
        %1181 = vxpose.xlu0.b32.cont [10/16] 0.0, 128
        %1182 = vxpose.xlu0.b32.cont [11/16] 0.0, 128
        %1183 = vxpose.xlu0.b32.cont [12/16] 0.0, 128
        %1184 = vxpose.xlu0.b32.cont [13/16] 0.0, 128
        %1185 = vxpose.xlu0.b32.cont [14/16] 0.0, 128
        %1186 = vxpose.xlu0.b32.cont [15/16] 0.0, 128
        %1187 = vxpose.xlu0.b32.end [16/16] 0.0, 128
        %v1188 = vpop.trf.xlu0
        %v1189 = vpop.trf.xlu0
        %v1190 = vpop.trf.xlu0
        %v1191 = vpop.trf.xlu0
        %v1192 = vpop.trf.xlu0
        %v1193 = vpop.trf.xlu0
        %v1194 = vpop.trf.xlu0
        %v1195 = vpop.trf.xlu0
        %v1196 = vpop.trf.xlu0
        %v1197 = vpop.trf.xlu0
        %v1198 = vpop.trf.xlu0
        %v1199 = vpop.trf.xlu0
        %v1200 = vpop.trf.xlu0
        %v1201 = vpop.trf.xlu0
        %v1202 = vpop.trf.xlu0
        %v1203 = vpop.trf.xlu0
        %v1205 = vsel %vm306, %v580, 0
        %v1208 = vsel %vm306, %v612, 0
        %v1211 = vsel %vm306, %v644, 0
        %v1214 = vsel %vm306, %v676, 0
        %v1217 = vsel %vm306, %v708, 0
        %v1220 = vsel %vm306, %v740, 0
        %v1223 = vsel %vm306, %v772, 0
        %v1226 = vsel %vm306, %v804, 0
        %v1229 = vsel %vm306, %v836, 0
        %v1232 = vsel %vm306, %v868, 0
        %v1235 = vsel %vm306, %v900, 0
        %v1238 = vsel %vm306, %v932, 0
        %v1241 = vsel %vm306, %v964, 0
        %v1244 = vsel %vm306, %v996, 0
        %v1247 = vsel %vm306, %v1028, 0
        %v1250 = vsel %vm306, %v1060, 0
        %v1253 = vsel %vm306, %v1092, 0
        %v1256 = vsel %vm306, %v1124, 0
        %v1259 = vsel %vm306, %v1156, 0
        %v1262 = vsel %vm306, %v1188, 0
        %1264 = vmatpush.msra.mxu0 0.0
        %1265 = vmatpush.msra.mxu0 0.0
        %1266 = vmatpush.msra.mxu0 0.0
        %1267 = vmatpush.msra.mxu0 0.0
        %1268 = vmatpush.msra.mxu0 0.0
        %1269 = vmatpush.msra.mxu0 0.0
        %1270 = vmatpush.msra.mxu0 0.0
        %1271 = vmatpush.msra.mxu0 0.0
        %1272 = vmatpush.msra.mxu0 0.0
        %1273 = vmatpush.msra.mxu0 0.0
        %1274 = vmatpush.msra.mxu0 0.0
        %1275 = vmatpush.msra.mxu0 0.0
        %1276 = vmatpush.msra.mxu0 0.0
        %1277 = vmatpush.msra.mxu0 0.0
        %1278 = vmatpush.msra.mxu0 %v305
        %1279 = vmatpush.msra.mxu0 %v304
        %1280 = vmatmul.f32.gmra.mxu0 %v1205
        %v1281 = vpop.f32.mrf.mxu0
        %v1282 = vadd.f32 0.0, %v1281
        %1283 = vmatmul.f32.gmra.mxu0 %v1208
        %v1284 = vpop.f32.mrf.mxu0
        %v1285 = vadd.f32 0.0, %v1284
        %1286 = vmatmul.f32.gmra.mxu0 %v1211
        %v1287 = vpop.f32.mrf.mxu0
        %v1288 = vadd.f32 0.0, %v1287
        %1289 = vmatmul.f32.gmra.mxu0 %v1214
        %v1290 = vpop.f32.mrf.mxu0
        %v1291 = vadd.f32 0.0, %v1290
        %1292 = vmatmul.f32.gmra.mxu0 %v1217
        %v1293 = vpop.f32.mrf.mxu0
        %v1294 = vadd.f32 0.0, %v1293
        %1295 = vmatmul.f32.gmra.mxu0 %v1220
        %v1296 = vpop.f32.mrf.mxu0
        %v1297 = vadd.f32 0.0, %v1296
        %1298 = vmatmul.f32.gmra.mxu0 %v1223
        %v1299 = vpop.f32.mrf.mxu0
        %v1300 = vadd.f32 0.0, %v1299
        %1301 = vmatmul.f32.gmra.mxu0 %v1226
        %v1302 = vpop.f32.mrf.mxu0
        %v1303 = vadd.f32 0.0, %v1302
        %1304 = vmatmul.f32.gmra.mxu0 %v1229
        %v1305 = vpop.f32.mrf.mxu0
        %v1306 = vadd.f32 0.0, %v1305
        %1307 = vmatmul.f32.gmra.mxu0 %v1232
        %v1308 = vpop.f32.mrf.mxu0
        %v1309 = vadd.f32 0.0, %v1308
        %1310 = vmatmul.f32.gmra.mxu0 %v1235
        %v1311 = vpop.f32.mrf.mxu0
        %v1312 = vadd.f32 0.0, %v1311
        %1313 = vmatmul.f32.gmra.mxu0 %v1238
        %v1314 = vpop.f32.mrf.mxu0
        %v1315 = vadd.f32 0.0, %v1314
        %1316 = vmatmul.f32.gmra.mxu0 %v1241
        %v1317 = vpop.f32.mrf.mxu0
        %v1318 = vadd.f32 0.0, %v1317
        %1319 = vmatmul.f32.gmra.mxu0 %v1244
        %v1320 = vpop.f32.mrf.mxu0
        %v1321 = vadd.f32 0.0, %v1320
        %1322 = vmatmul.f32.gmra.mxu0 %v1247
        %v1323 = vpop.f32.mrf.mxu0
        %v1324 = vadd.f32 0.0, %v1323
        %1325 = vmatmul.f32.gmra.mxu0 %v1250
        %v1326 = vpop.f32.mrf.mxu0
        %v1327 = vadd.f32 0.0, %v1326
        %1328 = vmatmul.f32.gmra.mxu0 %v1253
        %v1329 = vpop.f32.mrf.mxu0
        %v1330 = vadd.f32 0.0, %v1329
        %1331 = vmatmul.f32.gmra.mxu0 %v1256
        %v1332 = vpop.f32.mrf.mxu0
        %v1333 = vadd.f32 0.0, %v1332
        %1334 = vmatmul.f32.gmra.mxu0 %v1259
        %v1335 = vpop.f32.mrf.mxu0
        %v1336 = vadd.f32 0.0, %v1335
        %1337 = vmatmul.f32.gmra.mxu0 %v1262
        %v1338 = vpop.f32.mrf.mxu0
        %v1339 = vadd.f32 0.0, %v1338
        %1340 = vdwg.mxu0
        %v1341 = vmul.f32 %v1282, %v1282
        %v1342 = vmul.f32 %v1285, %v1285
        %v1343 = vmul.f32 %v1288, %v1288
        %v1344 = vmul.f32 %v1291, %v1291
        %v1345 = vmul.f32 %v1294, %v1294
        %v1346 = vmul.f32 %v1297, %v1297
        %v1347 = vmul.f32 %v1300, %v1300
        %v1348 = vmul.f32 %v1303, %v1303
        %v1349 = vmul.f32 %v1282, %v1294
        %v1350 = vmul.f32 %v1285, %v1297
        %v1351 = vmul.f32 %v1288, %v1300
        %v1352 = vmul.f32 %v1291, %v1303
        %v1353 = vsub.f32 %v1306, %v1341
        %v1354 = vsub.f32 %v1309, %v1342
        %v1355 = vsub.f32 %v1312, %v1343
        %v1356 = vsub.f32 %v1315, %v1344
        %v1357 = vsub.f32 %v1318, %v1345
        %v1358 = vsub.f32 %v1321, %v1346
        %v1359 = vsub.f32 %v1324, %v1347
        %v1360 = vsub.f32 %v1327, %v1348
        %v1361 = vsub.f32 %v1330, %v1349
        %v1362 = vsub.f32 %v1333, %v1350
        %v1363 = vsub.f32 %v1336, %v1351
        %v1364 = vsub.f32 %v1339, %v1352
        %v1365 = vmul.f32 %v1349, 2.0
        %v1366 = vmul.f32 %v1350, 2.0
        %v1367 = vmul.f32 %v1351, 2.0
        %v1368 = vmul.f32 %v1352, 2.0
        %v1369 = vadd.f32 %v1365, 0.0001
        %v1370 = vadd.f32 %v1366, 0.0001
        %v1371 = vadd.f32 %v1367, 0.0001
        %v1372 = vadd.f32 %v1368, 0.0001
        %v1373 = vmul.f32 %v1361, 2.0
        %v1374 = vmul.f32 %v1362, 2.0
        %v1375 = vmul.f32 %v1363, 2.0
        %v1376 = vmul.f32 %v1364, 2.0
        %v1377 = vadd.f32 %v1373, 0.0009
        %v1378 = vadd.f32 %v1374, 0.0009
        %v1379 = vadd.f32 %v1375, 0.0009
        %v1380 = vadd.f32 %v1376, 0.0009
        %v1381 = vmul.f32 %v1369, %v1377
        %v1382 = vmul.f32 %v1370, %v1378
        %v1383 = vmul.f32 %v1371, %v1379
        %v1384 = vmul.f32 %v1372, %v1380
        %v1385 = vadd.f32 %v1341, %v1345
        %v1386 = vadd.f32 %v1342, %v1346
        %v1387 = vadd.f32 %v1343, %v1347
        %v1388 = vadd.f32 %v1344, %v1348
        %v1389 = vadd.f32 %v1385, 0.0001
        %v1390 = vadd.f32 %v1386, 0.0001
        %v1391 = vadd.f32 %v1387, 0.0001
        %v1392 = vadd.f32 %v1388, 0.0001
        %v1393 = vadd.f32 %v1353, %v1357
        %v1394 = vadd.f32 %v1354, %v1358
        %v1395 = vadd.f32 %v1355, %v1359
        %v1396 = vadd.f32 %v1356, %v1360
        %v1397 = vadd.f32 %v1393, 0.0009
        %v1398 = vadd.f32 %v1394, 0.0009
        %v1399 = vadd.f32 %v1395, 0.0009
        %v1400 = vadd.f32 %v1396, 0.0009
        %v1401 = vmul.f32 %v1389, %v1397
        %v1402 = vmul.f32 %v1390, %v1398
        %v1403 = vmul.f32 %v1391, %v1399
        %v1404 = vmul.f32 %v1392, %v1400
        %v1405 = vrcp.pop %v1401
        %v1406 = vmul.f32 %v1401, %v1405
        %v1407 = vsub.f32 1.0, %v1406
        %v1408 = vmul.f32 %v1405, %v1407
        %v1409 = vadd.f32 %v1405, %v1408
        %vm1410 = vweird.f32 %v1401
        %vm1411 = vweird.f32 %v1405
        %vm1412 = vmor %vm1410, %vm1411
        %v1413 = vsel %vm1412, %v1405, %v1409
        %v1414 = vand.u32 2147483647, %v1401
        %vm1415 = vcmp.eq.f32.partialorder %v1414, 8.507059e+37
        %v1416 = vand.u32 %v1401, 2147483648
        %v1417 = vor.u32 1.1754944e-38, %v1416
        %v1418 = vsel %vm1415, %v1417, %v1413
        %v1419 = vmul.f32 %v1381, %v1418
        %v1420 = vrcp.pop %v1402
        %v1421 = vmul.f32 %v1402, %v1420
        %v1422 = vsub.f32 1.0, %v1421
        %v1423 = vmul.f32 %v1420, %v1422
        %v1424 = vadd.f32 %v1420, %v1423
        %vm1425 = vweird.f32 %v1402
        %vm1426 = vweird.f32 %v1420
        %vm1427 = vmor %vm1425, %vm1426
        %v1428 = vsel %vm1427, %v1420, %v1424
        %v1429 = vand.u32 2147483647, %v1402
        %vm1430 = vcmp.eq.f32.partialorder %v1429, 8.507059e+37
        %v1431 = vand.u32 %v1402, 2147483648
        %v1432 = vor.u32 1.1754944e-38, %v1431
        %v1433 = vsel %vm1430, %v1432, %v1428
        %v1434 = vmul.f32 %v1382, %v1433
        %v1435 = vrcp.pop %v1403
        %v1436 = vmul.f32 %v1403, %v1435
        %v1437 = vsub.f32 1.0, %v1436
        %v1438 = vmul.f32 %v1435, %v1437
        %v1439 = vadd.f32 %v1435, %v1438
        %vm1440 = vweird.f32 %v1403
        %vm1441 = vweird.f32 %v1435
        %vm1442 = vmor %vm1440, %vm1441
        %v1443 = vsel %vm1442, %v1435, %v1439
        %v1444 = vand.u32 2147483647, %v1403
        %vm1445 = vcmp.eq.f32.partialorder %v1444, 8.507059e+37
        %v1446 = vand.u32 %v1403, 2147483648
        %v1447 = vor.u32 1.1754944e-38, %v1446
        %v1448 = vsel %vm1445, %v1447, %v1443
        %v1449 = vmul.f32 %v1383, %v1448
        %v1450 = vrcp.pop %v1404
        %v1451 = vmul.f32 %v1404, %v1450
        %v1452 = vsub.f32 1.0, %v1451
        %v1453 = vmul.f32 %v1450, %v1452
        %v1454 = vadd.f32 %v1450, %v1453
        %vm1455 = vweird.f32 %v1404
        %vm1456 = vweird.f32 %v1450
        %vm1457 = vmor %vm1455, %vm1456
        %v1458 = vsel %vm1457, %v1450, %v1454
        %v1459 = vand.u32 2147483647, %v1404
        %vm1460 = vcmp.eq.f32.partialorder %v1459, 8.507059e+37
        %v1461 = vand.u32 %v1404, 2147483648
        %v1462 = vor.u32 1.1754944e-38, %v1461
        %v1463 = vsel %vm1460, %v1462, %v1458
        %v1464 = vmul.f32 %v1384, %v1463
        %v1465 = vlaneseq
        %v1466 = vshrl.u32 %v1465, 7
        %v1467 = vlaneseq
        %v1468 = vand.u32 %v1467, 127
        %vm1469 = vcmp.lt.s32.totalorder %v1466, 6
        %vm1470 = vcmp.lt.s32.totalorder %v1468, 6
        %vm1471 = vmand %vm1469, %vm1470
        %v1472 = vsel %vm1471, %v1419, 0.0
        %v1473 = vsel %vm1471, %v1434, 0.0
        %v1474 = vsel %vm1471, %v1449, 0.0
        %v1475 = vsel %vm1471, %v1464, 0.0
        %vm1476 = vcmask 64512
        %v1477 = vsel %vm1476, %v1472, 0.0
        %1478 = vadd.xlane.f32.xlu0 %v1477
        %v1479 = vpop.xlane.xlu0 %1478
        %v1480 = vsel %vm1476, %v1473, 0.0
        %1481 = vadd.xlane.f32.xlu0 %v1480
        %v1482 = vpop.xlane.xlu0 %1481
        %v1483 = vsel %vm1476, %v1474, 0.0
        %1484 = vadd.xlane.f32.xlu0 %v1483
        %v1485 = vpop.xlane.xlu0 %1484
        %v1486 = vsel %vm1476, %v1475, 0.0
        %1487 = vadd.xlane.f32.xlu0 %v1486
        %v1488 = vpop.xlane.xlu0 %1487
        %v1493 = vperm.slane %v1479, %v1468
        %v1494 = vperm.slane %v1482, %v1468
        %v1495 = vperm.slane %v1485, %v1468
        %v1496 = vperm.slane %v1488, %v1468
        %vm1497 = vcmask 1041409
        %v1498 = vsel %vm1497, %v1494, %v1493
        %vm1499 = vcmask 1042434
        %v1500 = vsel %vm1499, %v1495, %v1498
        %vm1501 = vcmask 1043459
        %v1502 = vsel %vm1501, %v1496, %v1500
        %vm1504 = vcmask 60416
        %v1505 = vsel %vm1504, %v1502, 0.0
        %1506 = vadd.xlane.f32.xlu0 %v1505
        %v1507 = vpop.xlane.xlu0 %1506
        %v1508 = vmul.f32 %v1507, 0.027777778
        %v1509 = vmax.f32 %v1508, 0.0
        %v1511 = vperm.slane %v1509, %v1468
        %vm1513 = vcmask 24576
        %1514 = vst.msk [vmem:[%s231] sm:$0x1] %vm1513, %v1511
        %s1515 = sand.u32 %s104, 1
        %s1516 = scalar_lea.sflag [#allocation4], %s1515
        %s1517 = sand.u32 %s104, 1
        %s1518 = scalar_lea.vmem [#allocation7], %s1517
        // Predicated region
        $region41: #{tpu_custom_call.1} parent=31 // pred_check
          %p1519 = pneg %p114
        $region42: #{tpu_custom_call.1} parent=31 // pred_check_branch
          %1521 = sbr.rel (%p1519) target = $region44
        $region43: #{tpu_custom_call.1} parent=31 // pred_region
          %1523 = vsyncadd %s1516, 0
          %s1524 = scalar_lea.hbm %s3, %s23
          %s1526 = sshll.u32 %s1518, 4
          %s1527 = int_to_ptr.vmem [resolvable:$true] %s1526
          %s1528 = sshll.u32 %s1524, 4
          %s1529 = int_to_ptr.hbm [resolvable:$true] %s1528
          %1531 = dma.vmem_to_hbm [thread:$0]  %s1527, 16, %s1529, %s1516
        $region44: #{tpu_custom_call.1} parent=31 // pred_fallthru
          _
      $region32: #{tpu_custom_call.1} parent=5 // pred_fallthru
        _
      %p1532 = scmp.le.s32.totalorder 2, %s18
      // Predicated region
      $region45: #{tpu_custom_call.1} parent=5 // pred_check
        %p1533 = pneg %p1532
      $region46: #{tpu_custom_call.1} parent=5 // pred_check_branch
        %1535 = sbr.rel (%p1533) target = $region48
      $region47: #{tpu_custom_call.1} parent=5 // pred_region
        %s1536 = ssub.s32 %s18, 2
        // Predicated region
        $region49: #{tpu_custom_call.1} parent=47 // pred_check
          %p1537 = pneg %p120
        $region50: #{tpu_custom_call.1} parent=47 // pred_check_branch
          %1539 = sbr.rel (%p1537) target = $region52
        $region51: #{tpu_custom_call.1} parent=47 // pred_region
          %s1540 = sand.u32 %s105, 1
          %s1541 = scalar_lea.sflag [#allocation4], %s1540
          %s1542 = sand.u32 %s105, 1
          %s1543 = scalar_lea.vmem [#allocation7], %s1542
          %1545 = dma.done %s1541, 16
        $region52: #{tpu_custom_call.1} parent=47 // pred_fallthru
          _
      $region48: #{tpu_custom_call.1} parent=5 // pred_fallthru
        _
    $region6: #{tpu_custom_call.1} parent=1 // loop_footer
      %s22 = sadd.s32 1, %s18
    $region7: #{tpu_custom_call.1} parent=1 // loop_footer_branch
      %17 = sbr.rel target = $region3
    $region8: #{tpu_custom_call.1} parent=1 // loop_exit
      _
    %1546 = vsyncpa [#allocation3], 1
    %s1547 = scalar_lea.sflag [#allocation3], 1
    %1548 = vsyncpa %s1547, 1
    %1549 = vsyncpa [#allocation6], 1
    %s1550 = scalar_lea.sflag [#allocation6], 1
    %1551 = vsyncpa %s1550, 1
    %1552 = vsyncpa [#allocation4], 1
    %s1553 = scalar_lea.sflag [#allocation4], 1
    %1554 = vsyncpa %s1553, 1

</llo_original>
